<compile_context>
chip_gen: v7x
topology: tpu7x:2x2x1
jax: 0.10.0
libtpu: 0.0.40
codegen_flags: <defaults>
</compile_context>

<pallas_src>
import math

import numpy as np
import jax
import jax.numpy as jnp
from jax import lax
from jax.experimental import pallas as pl
from jax.experimental.pallas import tpu as pltpu  # noqa: F401  (kept for TPU backend)

# ----------------------------- problem sizes --------------------------------
B = 2
C = 32                      # in_channels (GroupNorm(num_groups=32) => 1 channel / group)
H_IMG = W_IMG = 4
HW = H_IMG * W_IMG          # 16 tokens per image
N_HEADS = 4
D_HEAD = 8
INNER = N_HEADS * D_HEAD    # 32 = transformer width (== proj_in output channels)
CTX_DIM = 32
S_CTX = 8
FF_INNER = 4 * INNER        # 128 (GEGLU inner dim, mult=4)
SCALE = D_HEAD ** -0.5
LN_EPS = 1e-5               # nn.LayerNorm default
GN_EPS = 1e-6               # Normalize() GroupNorm eps
NQ = B * HW                 # 32 query tokens total
NK_SELF = NQ                # 32 keys (self-attn)
NK_CROSS = B * S_CTX        # 16 keys (cross-attn)
W_SELF = N_HEADS * NK_SELF  # 128 score columns (head, key)
W_CROSS = N_HEADS * NK_CROSS  # 64

assert C == 32, "kernel specializes GroupNorm(num_groups=32) to one channel per group"

# Packed weight slab (all 32-row matrices); every segment starts on a 128-lane boundary.
OFF_PIN, OFF_QP1, OFF_VK1, OFF_WO1 = 0, 128, 256, 384
OFF_QP2, OFF_VK2, OFF_WO2, OFF_WP, OFF_POUT = 512, 640, 768, 896, 1152
W32_WIDTH = 1184

# Constant slabs (precomputed masks / index structure), 128-lane-aligned segments.
CMQ_WIDTH = 320   # [m_avg(0:32) | amask_self(128:256) | amask_cross(256:320)]
CS_WIDTH = 160    # [blk_self(0:64)  | rep_self(128:160)]
CX_WIDTH = 144    # [blk_cross(0:64) | rep_cross(128:144)]

VEC_KEYS = ["gn_g", "gn_b", "pin_b", "g1", "b1", "g2", "b2", "g3", "b3",
            "bo1", "bo2", "bout", "pout_b"]
(V_GN_G, V_GN_B, V_PIN_B, V_G1, V_B1, V_G2, V_B2, V_G3, V_B3,
 V_BO1, V_BO2, V_BOUT, V_POUT_B) = range(len(VEC_KEYS))


# ----------------------- shared math (pure jnp) ------------------------------
def _gelu(x):
    # F.gelu default = exact erf-based GELU (kept exact for module parity).
    return 0.5 * x * (1.0 + lax.erf(x * (1.0 / math.sqrt(2.0))))


def _ln(h, g, b):
    # PyTorch LayerNorm: biased variance, eps inside sqrt.
    mu = jnp.mean(h, axis=-1, keepdims=True)
    var = jnp.mean((h - mu) ** 2, axis=-1, keepdims=True)
    return (h - mu) * lax.rsqrt(var + LN_EPS) * g + b


def _mha(qpad, kvcat, rep, blk, amask, wo, bo):
    """Multi-head attention, both batch elements and all heads in 2-D slabs.

    qpad : (NQ, 2*INNER)  zero in the V half, Q*scale in the K half (head, d) lanes
    kvcat: (NK, 2*INNER)  rows = (batch, key pos), lanes = [V | K]
    rep  : (W, NK)        precomputed 0/1 row-replication matrix (MXU expansion)
    blk  : (W, 2*INNER)   precomputed block-diagonal head mask
    amask: (NQ, W)        precomputed additive cross-batch mask (0 / -1e30)
    """
    f32 = jnp.float32
    # head-expanded [V | K]: row replication on the MXU, then one mask multiply
    kv_exp = jnp.dot(rep, kvcat, preferred_element_type=f32) * blk          # (W, 2*INNER)

    # scores: rows = queries, cols = (head, key); V lanes of qpad are zero so only
    # the K half contributes.  Additive -1e30 keeps cross-batch columns out.
    g = lax.dot_general(qpad, kv_exp, (((1,), (1,)), ((), ())),
                        preferred_element_type=f32) + amask                  # (NQ, W)
    e = jnp.exp(g - jnp.max(g, axis=-1, keepdims=True))                      # masked -> 0 exactly

    # P @ V (lanes 0..INNER-1 of pv) and per-(row, head) denominators, two matmuls
    pv = jnp.dot(e, kv_exp, preferred_element_type=f32)                      # (NQ, 2*INNER)
    den = jnp.dot(e, blk[:, :INNER], preferred_element_type=f32)             # (NQ, INNER)
    out = pv[:, :INNER] * pl.reciprocal(jnp.maximum(den, 1e-30), approx=True)
    return jnp.dot(out, wo, preferred_element_type=f32) + bo


# ------------------------------ Pallas kernel --------------------------------
def spatial_transformer_kernel(x_ref, ctx_ref, w32_ref, wout_ref, vec_ref, bp_ref,
                               cmq_ref, cs_ref, cx_ref, o_ref):
    f32 = jnp.float32
    x_in = x_ref[...]                       # (NQ, C), channels-last tokens
    vec = vec_ref[...]                      # (13, C)

    def vrow(i):                            # (1, C) parameter row
        return vec[i:i + 1, :]

    def wseg(off, width):                   # static 128-aligned window into weight slab
        return w32_ref[:, off:off + width]

    # precomputed constant structures (no iota/mod/where construction in-kernel)
    m_avg = cmq_ref[:, 0:NQ]                # (NQ, NQ) per-batch spatial averaging
    amask_s = cmq_ref[:, 128:128 + W_SELF]  # (NQ, 128) additive cross-batch mask
    amask_x = cmq_ref[:, 256:256 + W_CROSS]  # (NQ, 64)
    blk_s = cs_ref[:, 0:2 * INNER]          # (128, 64) head block mask
    rep_s = cs_ref[:, 128:128 + NK_SELF]    # (128, 32) row replication
    blk_x = cx_ref[:, 0:2 * INNER]          # (64, 64)
    rep_x = cx_ref[:, 128:128 + NK_CROSS]   # (64, 16)

    # ---- GroupNorm (num_groups == C -> per-channel spatial stats), two-pass ----
    mean = jnp.dot(m_avg, x_in, preferred_element_type=f32)                  # (NQ, C)
    xc = x_in - mean
    var = jnp.dot(m_avg, xc * xc, preferred_element_type=f32)
    h = xc * lax.rsqrt(var + GN_EPS) * vrow(V_GN_G) + vrow(V_GN_B)

    # ---- proj_in (1x1 conv == per-token linear) ----
    h = jnp.dot(h, wseg(OFF_PIN, INNER), preferred_element_type=f32) + vrow(V_PIN_B)

    # ---- BasicTransformerBlock ----
    # self-attention (Q weights zero-padded in the V half, scale prefolded)
    n1 = _ln(h, vrow(V_G1), vrow(V_B1))
    qpad1 = jnp.dot(n1, wseg(OFF_QP1, 2 * INNER), preferred_element_type=f32)
    kv1 = jnp.dot(n1, wseg(OFF_VK1, 2 * INNER), preferred_element_type=f32)  # [V | K]
    h = _mha(qpad1, kv1, rep_s, blk_s, amask_s, wseg(OFF_WO1, INNER), vrow(V_BO1)) + h

    # cross-attention (K/V from context)
    n2 = _ln(h, vrow(V_G2), vrow(V_B2))
    qpad2 = jnp.dot(n2, wseg(OFF_QP2, 2 * INNER), preferred_element_type=f32)
    kv2 = jnp.dot(ctx_ref[...], wseg(OFF_VK2, 2 * INNER), preferred_element_type=f32)
    h = _mha(qpad2, kv2, rep_x, blk_x, amask_x, wseg(OFF_WO2, INNER), vrow(V_BO2)) + h

    # GEGLU feed-forward (128-lane aligned halves of the 256-wide projection)
    n3 = _ln(h, vrow(V_G3), vrow(V_B3))
    proj = jnp.dot(n3, wseg(OFF_WP, 2 * FF_INNER), preferred_element_type=f32) + bp_ref[...]
    a, gate = proj[:, :FF_INNER], proj[:, FF_INNER:]
    h = jnp.dot(a * _gelu(gate), wout_ref[...], preferred_element_type=f32) + vrow(V_BOUT) + h

    # ---- proj_out (1x1 conv) + outer residual ----
    y = jnp.dot(h, wseg(OFF_POUT, C), preferred_element_type=f32) + vrow(V_POUT_B)
    o_ref[...] = y + x_in
    # TODO(synk): dropout layers are identity (p=0.0 / eval); GroupNorm is specialized
    # to num_groups == num_channels (the configuration used here).  On v7x, a 2-wide
    # "parallel" batch grid would use the second TensorCore; kept fused for v5e/v6e.


# ------------------------------- wrapper --------------------------------------
@jax.jit
def spatial_transformer(x, ctx, w32, wout, vecs, bp, cmq, cs, cx):
    # x: (B, C, H, W) NCHW like the PyTorch module; context: (B, S_CTX, CTX_DIM)
    xf = jnp.transpose(x, (0, 2, 3, 1)).reshape(B * HW, C)      # channels-last tokens
    cf = ctx.reshape(B * S_CTX, CTX_DIM)
    yf = pl.pallas_call(
        spatial_transformer_kernel,
        out_shape=jax.ShapeDtypeStruct((B * HW, C), jnp.float32),
    )(xf, cf, w32, wout, vecs, bp, cmq, cs, cx)
    return jnp.transpose(yf.reshape(B, H_IMG, W_IMG, C), (0, 3, 1, 2))


# --------------------------- parameters & packing -----------------------------
def make_params(key):
    ks = jax.random.split(key, 24)

    def w(k, shape, scale=0.05):
        return jax.random.normal(k, shape, jnp.float32) * scale

    def affine(k, n):
        kg, kb = jax.random.split(k)
        return (1.0 + 0.1 * jax.random.normal(kg, (n,), jnp.float32),
                0.05 * jax.random.normal(kb, (n,), jnp.float32))

    gn_g, gn_b = affine(ks[0], C)
    g1, b1 = affine(ks[1], INNER)
    g2, b2 = affine(ks[2], INNER)
    g3, b3 = affine(ks[3], INNER)
    p = dict(
        gn_g=gn_g, gn_b=gn_b,
        pin_w=w(ks[4], (C, INNER)), pin_b=w(ks[5], (INNER,)),
        g1=g1, b1=b1, g2=g2, b2=b2, g3=g3, b3=b3,
        # attn1 (self): to_q/k/v bias-free, to_out has bias; weights stored (in, out)
        wq1=w(ks[6], (INNER, INNER)), wk1=w(ks[7], (INNER, INNER)),
        wv1=w(ks[8], (INNER, INNER)), wo1=w(ks[9], (INNER, INNER)), bo1=w(ks[10], (INNER,)),
        # attn2 (cross): k/v take context_dim
        wq2=w(ks[11], (INNER, INNER)), wk2=w(ks[12], (CTX_DIM, INNER)),
        wv2=w(ks[13], (CTX_DIM, INNER)), wo2=w(ks[14], (INNER, INNER)), bo2=w(ks[15], (INNER,)),
        # FeedForward (GEGLU): proj (INNER -> 2*FF_INNER), out (FF_INNER -> INNER)
        wp=w(ks[16], (INNER, 2 * FF_INNER)), bp=w(ks[17], (2 * FF_INNER,)),
        wout=w(ks[18], (FF_INNER, INNER)), bout=w(ks[19], (INNER,)),
        # NOTE: PyTorch zero-initializes proj_out (zero_module); random init here
        # exercises the full data path — the forward math is identical.
        pout_w=w(ks[20], (INNER, C)), pout_b=w(ks[21], (C,)),
    )
    return p


def pack_params(p):
    """Pack into: (32, 1184) 128-aligned weight slab, wout, (13, 32) vectors, bp."""
    zero32 = jnp.zeros((INNER, INNER), jnp.float32)
    wq1_pad = jnp.concatenate([zero32, p["wq1"] * SCALE], axis=1)    # (32, 64) [0 | Q*s]
    wvk1 = jnp.concatenate([p["wv1"], p["wk1"]], axis=1)             # (32, 64) [V | K]
    wq2_pad = jnp.concatenate([zero32, p["wq2"] * SCALE], axis=1)
    wvk2 = jnp.concatenate([p["wv2"], p["wk2"]], axis=1)             # (32, 64) [V | K]
    segs = [(p["pin_w"], OFF_PIN), (wq1_pad, OFF_QP1), (wvk1, OFF_VK1),
            (p["wo1"], OFF_WO1), (wq2_pad, OFF_QP2), (wvk2, OFF_VK2),
            (p["wo2"], OFF_WO2), (p["wp"], OFF_WP), (p["pout_w"], OFF_POUT)]
    w32 = jnp.zeros((INNER, W32_WIDTH), jnp.float32)
    for m, off in segs:
        w32 = w32.at[:, off:off + m.shape[1]].set(m)
    vecs = jnp.stack([p[k] for k in VEC_KEYS], axis=0)               # (13, 32)
    bp = p["bp"].reshape(1, 2 * FF_INNER)
    return w32, p["wout"], vecs, bp


def make_constants():
    """Precompute the averaging matrix, head masks, replication matrices and
    additive cross-batch masks wrapper-side (review item: no in-kernel iota/mask)."""
    r = np.arange(NQ)
    m_avg = ((r[:, None] // HW) == (r[None, :] // HW)).astype(np.float32) / HW

    def blk(nk):
        w = N_HEADS * nk
        rh = np.arange(w)[:, None] // nk
        ch = (np.arange(2 * INNER)[None, :] % INNER) // D_HEAD
        return (rh == ch).astype(np.float32)

    def rep(nk):
        w = N_HEADS * nk
        return (np.arange(w)[:, None] % nk == np.arange(nk)[None, :]).astype(np.float32)

    def amask(nk):
        w = N_HEADS * nk
        qb = np.arange(NQ)[:, None] // HW
        kb = (np.arange(w)[None, :] % nk) // (nk // B)
        return np.where(qb == kb, 0.0, -1e30).astype(np.float32)

    cmq = np.zeros((NQ, CMQ_WIDTH), np.float32)
    cmq[:, 0:NQ] = m_avg
    cmq[:, 128:128 + W_SELF] = amask(NK_SELF)
    cmq[:, 256:256 + W_CROSS] = amask(NK_CROSS)

    cs = np.zeros((W_SELF, CS_WIDTH), np.float32)
    cs[:, 0:2 * INNER] = blk(NK_SELF)
    cs[:, 128:128 + NK_SELF] = rep(NK_SELF)

    cx = np.zeros((W_CROSS, CX_WIDTH), np.float32)
    cx[:, 0:2 * INNER] = blk(NK_CROSS)
    cx[:, 128:128 + NK_CROSS] = rep(NK_CROSS)

    return jnp.asarray(cmq), jnp.asarray(cs), jnp.asarray(cx)


# ----------------------------- pure-JAX reference -----------------------------
def _ln_ref(h, g, b):
    mu = jnp.mean(h, axis=-1, keepdims=True)
    var = jnp.mean((h - mu) ** 2, axis=-1, keepdims=True)
    return (h - mu) / jnp.sqrt(var + LN_EPS) * g + b


def _attn_ref(hq, hkv, wq, wk, wv, wo, bo):
    q, k, v = hq @ wq, hkv @ wk, hkv @ wv

    def split(t):
        bb, ss, _ = t.shape
        return jnp.transpose(t.reshape(bb, ss, N_HEADS, D_HEAD), (0, 2, 1, 3))

    qh, kh, vh = split(q), split(k), split(v)
    sim = jnp.einsum("bhid,bhjd->bhij", qh, kh) * SCALE
    attn = jax.nn.softmax(sim, axis=-1)
    o = jnp.einsum("bhij,bhjd->bhid", attn, vh)
    o = jnp.transpose(o, (0, 2, 1, 3)).reshape(hq.shape[0], hq.shape[1], INNER)
    return o @ wo + bo


def reference_forward(x, ctx, p):
    b, c, hh, ww = x.shape
    # GroupNorm(num_groups=32) with C=32 -> per-channel spatial normalization
    xr = x.reshape(b, c, hh * ww)
    mu = jnp.mean(xr, axis=2, keepdims=True)
    var = jnp.mean((xr - mu) ** 2, axis=2, keepdims=True)
    xn = (xr - mu) / jnp.sqrt(var + GN_EPS) * p["gn_g"][None, :, None] + p["gn_b"][None, :, None]
    tok = jnp.transpose(xn.reshape(b, c, hh, ww), (0, 2, 3, 1)).reshape(b, hh * ww, c)
    h = tok @ p["pin_w"] + p["pin_b"]
    # BasicTransformerBlock
    n1 = _ln_ref(h, p["g1"], p["b1"])
    h = _attn_ref(n1, n1, p["wq1"], p["wk1"], p["wv1"], p["wo1"], p["bo1"]) + h
    n2 = _ln_ref(h, p["g2"], p["b2"])
    h = _attn_ref(n2, ctx, p["wq2"], p["wk2"], p["wv2"], p["wo2"], p["bo2"]) + h
    n3 = _ln_ref(h, p["g3"], p["b3"])
    proj = n3 @ p["wp"] + p["bp"]
    a, gate = proj[..., :FF_INNER], proj[..., FF_INNER:]
    h = (a * _gelu(gate)) @ p["wout"] + p["bout"] + h
    # proj_out + outer residual
    y = h @ p["pout_w"] + p["pout_b"]
    y = jnp.transpose(y.reshape(b, hh, ww, c), (0, 3, 1, 2))
    return y + x


# ------------------------------------ main ------------------------------------
if __name__ == "__main__":
    key = jax.random.PRNGKey(0)
    k_x, k_c, k_p = jax.random.split(key, 3)

    x = jax.random.normal(k_x, (B, C, H_IMG, W_IMG), jnp.float32)
    ctx = jax.random.normal(k_c, (B, S_CTX, CTX_DIM), jnp.float32)
    params = make_params(k_p)
    w32, wout, vecs, bp = pack_params(params)
    cmq, cs, cx = make_constants()

    out = jax.block_until_ready(spatial_transformer(x, ctx, w32, wout, vecs, bp, cmq, cs, cx))
    ref = jax.block_until_ready(reference_forward(x, ctx, params))

    assert out.shape == x.shape
    max_err = float(jnp.max(jnp.abs(out - ref)))
    assert bool(jnp.allclose(out, ref, atol=2e-3, rtol=2e-3)), (
        "mismatch vs reference: max |err| = %e" % max_err)

    print("KERNEL_OK")
</pallas_src>

<mosaic_0001>
module attributes {stable_mosaic.version = 11 : i64} {
  func.func @spatial_transformer_kernel(%arg0: memref<32x32xf32, #tpu.memory_space<vmem>>, %arg1: memref<16x32xf32, #tpu.memory_space<vmem>>, %arg2: memref<32x1184xf32, #tpu.memory_space<vmem>>, %arg3: memref<128x32xf32, #tpu.memory_space<vmem>>, %arg4: memref<13x32xf32, #tpu.memory_space<vmem>>, %arg5: memref<1x256xf32, #tpu.memory_space<vmem>>, %arg6: memref<32x320xf32, #tpu.memory_space<vmem>>, %arg7: memref<128x160xf32, #tpu.memory_space<vmem>>, %arg8: memref<64x144xf32, #tpu.memory_space<vmem>>, %arg9: memref<32x32xf32, #tpu.memory_space<vmem>>) attributes {dimension_semantics = [], scalar_prefetch = 0 : i64, scratch_operands = 0 : i64, tpu.core_type = #tpu.core_type<tc>} {
    %c0 = arith.constant 0 : index
    %c0_0 = arith.constant 0 : index
    %0 = vector.load %arg0[%c0, %c0_0] : memref<32x32xf32, #tpu.memory_space<vmem>>, vector<32x32xf32>
    %c0_1 = arith.constant 0 : index
    %c0_2 = arith.constant 0 : index
    %1 = vector.load %arg4[%c0_1, %c0_2] : memref<13x32xf32, #tpu.memory_space<vmem>>, vector<13x32xf32>
    %c0_3 = arith.constant 0 : index
    %c0_4 = arith.constant 0 : index
    %2 = vector.load %arg6[%c0_3, %c0_4] : memref<32x320xf32, #tpu.memory_space<vmem>>, vector<32x32xf32>
    %c0_5 = arith.constant 0 : index
    %c128 = arith.constant 128 : index
    %3 = vector.load %arg6[%c0_5, %c128] : memref<32x320xf32, #tpu.memory_space<vmem>>, vector<32x128xf32>
    %c0_6 = arith.constant 0 : index
    %c256 = arith.constant 256 : index
    %4 = vector.load %arg6[%c0_6, %c256] : memref<32x320xf32, #tpu.memory_space<vmem>>, vector<32x64xf32>
    %c0_7 = arith.constant 0 : index
    %c0_8 = arith.constant 0 : index
    %5 = vector.load %arg7[%c0_7, %c0_8] : memref<128x160xf32, #tpu.memory_space<vmem>>, vector<128x64xf32>
    %c0_9 = arith.constant 0 : index
    %c128_10 = arith.constant 128 : index
    %6 = vector.load %arg7[%c0_9, %c128_10] : memref<128x160xf32, #tpu.memory_space<vmem>>, vector<128x32xf32>
    %c0_11 = arith.constant 0 : index
    %c0_12 = arith.constant 0 : index
    %7 = vector.load %arg8[%c0_11, %c0_12] : memref<64x144xf32, #tpu.memory_space<vmem>>, vector<64x64xf32>
    %c0_13 = arith.constant 0 : index
    %c128_14 = arith.constant 128 : index
    %8 = vector.load %arg8[%c0_13, %c128_14] : memref<64x144xf32, #tpu.memory_space<vmem>>, vector<64x16xf32>
    %cst = arith.constant dense<0.000000e+00> : vector<32x32xf32>
    %9 = tpu.matmul %2, %0, %cst {dimension_numbers = #tpu.dot_dimension_numbers<[1], [0], [0], [1], [0, 0, 1, 1], [], []>} : vector<32x32xf32>, vector<32x32xf32>, vector<32x32xf32> -> vector<32x32xf32>
    %10 = arith.subf %0, %9 : vector<32x32xf32>
    %11 = arith.mulf %10, %10 : vector<32x32xf32>
    %cst_15 = arith.constant dense<0.000000e+00> : vector<32x32xf32>
    %12 = tpu.matmul %2, %11, %cst_15 {dimension_numbers = #tpu.dot_dimension_numbers<[1], [0], [0], [1], [0, 0, 1, 1], [], []>} : vector<32x32xf32>, vector<32x32xf32>, vector<32x32xf32> -> vector<32x32xf32>
    %cst_16 = arith.constant 9.99999997E-7 : f32
    %13 = vector.broadcast %cst_16 : f32 to vector<32x32xf32>
    %14 = arith.addf %12, %13 : vector<32x32xf32>
    %15 = math.rsqrt %14 : vector<32x32xf32>
    %16 = arith.mulf %10, %15 : vector<32x32xf32>
    %17 = vector.extract_strided_slice %1 {offsets = [0, 0], sizes = [1, 32], strides = [1, 1]} : vector<13x32xf32> to vector<1x32xf32>
    %18 = vector.broadcast %17 : vector<1x32xf32> to vector<32x32xf32>
    %19 = arith.mulf %16, %18 : vector<32x32xf32>
    %20 = vector.extract_strided_slice %1 {offsets = [1, 0], sizes = [1, 32], strides = [1, 1]} : vector<13x32xf32> to vector<1x32xf32>
    %21 = vector.broadcast %20 : vector<1x32xf32> to vector<32x32xf32>
    %22 = arith.addf %19, %21 : vector<32x32xf32>
    %c0_17 = arith.constant 0 : index
    %c0_18 = arith.constant 0 : index
    %23 = vector.load %arg2[%c0_17, %c0_18] : memref<32x1184xf32, #tpu.memory_space<vmem>>, vector<32x32xf32>
    %cst_19 = arith.constant dense<0.000000e+00> : vector<32x32xf32>
    %24 = tpu.matmul %22, %23, %cst_19 {dimension_numbers = #tpu.dot_dimension_numbers<[1], [0], [0], [1], [0, 0, 1, 1], [], []>} : vector<32x32xf32>, vector<32x32xf32>, vector<32x32xf32> -> vector<32x32xf32>
    %25 = vector.extract_strided_slice %1 {offsets = [2, 0], sizes = [1, 32], strides = [1, 1]} : vector<13x32xf32> to vector<1x32xf32>
    %26 = vector.broadcast %25 : vector<1x32xf32> to vector<32x32xf32>
    %27 = arith.addf %24, %26 : vector<32x32xf32>
    %28 = vector.extract_strided_slice %1 {offsets = [3, 0], sizes = [1, 32], strides = [1, 1]} : vector<13x32xf32> to vector<1x32xf32>
    %29 = vector.extract_strided_slice %1 {offsets = [4, 0], sizes = [1, 32], strides = [1, 1]} : vector<13x32xf32> to vector<1x32xf32>
    %cst_20 = arith.constant dense<0.000000e+00> : vector<32xf32>
    %30 = vector.multi_reduction <add>, %27, %cst_20 [1] : vector<32x32xf32> to vector<32xf32>
    %31 = vector.shape_cast %30 : vector<32xf32> to vector<32x1xf32>
    %cst_21 = arith.constant 3.200000e+01 : f32
    %32 = vector.broadcast %cst_21 : f32 to vector<32x1xf32>
    %33 = arith.divf %31, %32 : vector<32x1xf32>
    %34 = vector.broadcast %33 : vector<32x1xf32> to vector<32x32xf32>
    %35 = arith.subf %27, %34 : vector<32x32xf32>
    %36 = arith.mulf %35, %35 : vector<32x32xf32>
    %cst_22 = arith.constant dense<0.000000e+00> : vector<32xf32>
    %37 = vector.multi_reduction <add>, %36, %cst_22 [1] : vector<32x32xf32> to vector<32xf32>
    %38 = vector.shape_cast %37 : vector<32xf32> to vector<32x1xf32>
    %cst_23 = arith.constant 3.200000e+01 : f32
    %39 = vector.broadcast %cst_23 : f32 to vector<32x1xf32>
    %40 = arith.divf %38, %39 : vector<32x1xf32>
    %41 = vector.broadcast %33 : vector<32x1xf32> to vector<32x32xf32>
    %42 = arith.subf %27, %41 : vector<32x32xf32>
    %cst_24 = arith.constant 9.99999974E-6 : f32
    %43 = vector.broadcast %cst_24 : f32 to vector<32x1xf32>
    %44 = arith.addf %40, %43 : vector<32x1xf32>
    %45 = math.rsqrt %44 : vector<32x1xf32>
    %46 = vector.broadcast %45 : vector<32x1xf32> to vector<32x32xf32>
    %47 = arith.mulf %42, %46 : vector<32x32xf32>
    %48 = vector.broadcast %28 : vector<1x32xf32> to vector<32x32xf32>
    %49 = arith.mulf %47, %48 : vector<32x32xf32>
    %50 = vector.broadcast %29 : vector<1x32xf32> to vector<32x32xf32>
    %51 = arith.addf %49, %50 : vector<32x32xf32>
    %c0_25 = arith.constant 0 : index
    %c128_26 = arith.constant 128 : index
    %52 = vector.load %arg2[%c0_25, %c128_26] : memref<32x1184xf32, #tpu.memory_space<vmem>>, vector<32x64xf32>
    %cst_27 = arith.constant dense<0.000000e+00> : vector<32x64xf32>
    %53 = tpu.matmul %51, %52, %cst_27 {dimension_numbers = #tpu.dot_dimension_numbers<[1], [0], [0], [1], [0, 0, 1, 1], [], []>} : vector<32x32xf32>, vector<32x64xf32>, vector<32x64xf32> -> vector<32x64xf32>
    %c0_28 = arith.constant 0 : index
    %c256_29 = arith.constant 256 : index
    %54 = vector.load %arg2[%c0_28, %c256_29] : memref<32x1184xf32, #tpu.memory_space<vmem>>, vector<32x64xf32>
    %cst_30 = arith.constant dense<0.000000e+00> : vector<32x64xf32>
    %55 = tpu.matmul %51, %54, %cst_30 {dimension_numbers = #tpu.dot_dimension_numbers<[1], [0], [0], [1], [0, 0, 1, 1], [], []>} : vector<32x32xf32>, vector<32x64xf32>, vector<32x64xf32> -> vector<32x64xf32>
    %c0_31 = arith.constant 0 : index
    %c384 = arith.constant 384 : index
    %56 = vector.load %arg2[%c0_31, %c384] : memref<32x1184xf32, #tpu.memory_space<vmem>>, vector<32x32xf32>
    %57 = vector.extract_strided_slice %1 {offsets = [9, 0], sizes = [1, 32], strides = [1, 1]} : vector<13x32xf32> to vector<1x32xf32>
    %cst_32 = arith.constant dense<0.000000e+00> : vector<128x64xf32>
    %58 = tpu.matmul %6, %55, %cst_32 {dimension_numbers = #tpu.dot_dimension_numbers<[1], [0], [0], [1], [0, 0, 1, 1], [], []>} : vector<128x32xf32>, vector<32x64xf32>, vector<128x64xf32> -> vector<128x64xf32>
    %59 = arith.mulf %58, %5 : vector<128x64xf32>
    %cst_33 = arith.constant dense<0.000000e+00> : vector<32x128xf32>
    %60 = tpu.matmul %53, %59, %cst_33 {dimension_numbers = #tpu.dot_dimension_numbers<[1], [1], [0], [0], [0, 0, 1, 0], [], []>} : vector<32x64xf32>, vector<128x64xf32>, vector<32x128xf32> -> vector<32x128xf32>
    %61 = arith.addf %60, %3 : vector<32x128xf32>
    %cst_34 = arith.constant dense<0xFF800000> : vector<32xf32>
    %62 = vector.multi_reduction <maximumf>, %61, %cst_34 [1] : vector<32x128xf32> to vector<32xf32>
    %63 = vector.shape_cast %62 : vector<32xf32> to vector<32x1xf32>
    %64 = vector.broadcast %63 : vector<32x1xf32> to vector<32x128xf32>
    %65 = arith.subf %61, %64 : vector<32x128xf32>
    %66 = math.exp %65 : vector<32x128xf32>
    %cst_35 = arith.constant dense<0.000000e+00> : vector<32x64xf32>
    %67 = tpu.matmul %66, %59, %cst_35 {dimension_numbers = #tpu.dot_dimension_numbers<[1], [0], [0], [1], [0, 0, 1, 1], [], []>} : vector<32x128xf32>, vector<128x64xf32>, vector<32x64xf32> -> vector<32x64xf32>
    %68 = vector.extract_strided_slice %5 {offsets = [0, 0], sizes = [128, 32], strides = [1, 1]} : vector<128x64xf32> to vector<128x32xf32>
    %cst_36 = arith.constant dense<0.000000e+00> : vector<32x32xf32>
    %69 = tpu.matmul %66, %68, %cst_36 {dimension_numbers = #tpu.dot_dimension_numbers<[1], [0], [0], [1], [0, 0, 1, 1], [], []>} : vector<32x128xf32>, vector<128x32xf32>, vector<32x32xf32> -> vector<32x32xf32>
    %70 = vector.extract_strided_slice %67 {offsets = [0, 0], sizes = [32, 32], strides = [1, 1]} : vector<32x64xf32> to vector<32x32xf32>
    %cst_37 = arith.constant 1.000000e-30 : f32
    %71 = vector.broadcast %cst_37 : f32 to vector<32x32xf32>
    %72 = arith.maximumf %69, %71 : vector<32x32xf32>
    %73 = tpu.reciprocal %72 {approx = true} : vector<32x32xf32> -> vector<32x32xf32>
    %74 = arith.mulf %70, %73 : vector<32x32xf32>
    %cst_38 = arith.constant dense<0.000000e+00> : vector<32x32xf32>
    %75 = tpu.matmul %74, %56, %cst_38 {dimension_numbers = #tpu.dot_dimension_numbers<[1], [0], [0], [1], [0, 0, 1, 1], [], []>} : vector<32x32xf32>, vector<32x32xf32>, vector<32x32xf32> -> vector<32x32xf32>
    %76 = vector.broadcast %57 : vector<1x32xf32> to vector<32x32xf32>
    %77 = arith.addf %75, %76 : vector<32x32xf32>
    %78 = arith.addf %77, %27 : vector<32x32xf32>
    %79 = vector.extract_strided_slice %1 {offsets = [5, 0], sizes = [1, 32], strides = [1, 1]} : vector<13x32xf32> to vector<1x32xf32>
    %80 = vector.extract_strided_slice %1 {offsets = [6, 0], sizes = [1, 32], strides = [1, 1]} : vector<13x32xf32> to vector<1x32xf32>
    %cst_39 = arith.constant dense<0.000000e+00> : vector<32xf32>
    %81 = vector.multi_reduction <add>, %78, %cst_39 [1] : vector<32x32xf32> to vector<32xf32>
    %82 = vector.shape_cast %81 : vector<32xf32> to vector<32x1xf32>
    %cst_40 = arith.constant 3.200000e+01 : f32
    %83 = vector.broadcast %cst_40 : f32 to vector<32x1xf32>
    %84 = arith.divf %82, %83 : vector<32x1xf32>
    %85 = vector.broadcast %84 : vector<32x1xf32> to vector<32x32xf32>
    %86 = arith.subf %78, %85 : vector<32x32xf32>
    %87 = arith.mulf %86, %86 : vector<32x32xf32>
    %cst_41 = arith.constant dense<0.000000e+00> : vector<32xf32>
    %88 = vector.multi_reduction <add>, %87, %cst_41 [1] : vector<32x32xf32> to vector<32xf32>
    %89 = vector.shape_cast %88 : vector<32xf32> to vector<32x1xf32>
    %cst_42 = arith.constant 3.200000e+01 : f32
    %90 = vector.broadcast %cst_42 : f32 to vector<32x1xf32>
    %91 = arith.divf %89, %90 : vector<32x1xf32>
    %92 = vector.broadcast %84 : vector<32x1xf32> to vector<32x32xf32>
    %93 = arith.subf %78, %92 : vector<32x32xf32>
    %cst_43 = arith.constant 9.99999974E-6 : f32
    %94 = vector.broadcast %cst_43 : f32 to vector<32x1xf32>
    %95 = arith.addf %91, %94 : vector<32x1xf32>
    %96 = math.rsqrt %95 : vector<32x1xf32>
    %97 = vector.broadcast %96 : vector<32x1xf32> to vector<32x32xf32>
    %98 = arith.mulf %93, %97 : vector<32x32xf32>
    %99 = vector.broadcast %79 : vector<1x32xf32> to vector<32x32xf32>
    %100 = arith.mulf %98, %99 : vector<32x32xf32>
    %101 = vector.broadcast %80 : vector<1x32xf32> to vector<32x32xf32>
    %102 = arith.addf %100, %101 : vector<32x32xf32>
    %c0_44 = arith.constant 0 : index
    %c512 = arith.constant 512 : index
    %103 = vector.load %arg2[%c0_44, %c512] : memref<32x1184xf32, #tpu.memory_space<vmem>>, vector<32x64xf32>
    %cst_45 = arith.constant dense<0.000000e+00> : vector<32x64xf32>
    %104 = tpu.matmul %102, %103, %cst_45 {dimension_numbers = #tpu.dot_dimension_numbers<[1], [0], [0], [1], [0, 0, 1, 1], [], []>} : vector<32x32xf32>, vector<32x64xf32>, vector<32x64xf32> -> vector<32x64xf32>
    %c0_46 = arith.constant 0 : index
    %c0_47 = arith.constant 0 : index
    %105 = vector.load %arg1[%c0_46, %c0_47] : memref<16x32xf32, #tpu.memory_space<vmem>>, vector<16x32xf32>
    %c0_48 = arith.constant 0 : index
    %c640 = arith.constant 640 : index
    %106 = vector.load %arg2[%c0_48, %c640] : memref<32x1184xf32, #tpu.memory_space<vmem>>, vector<32x64xf32>
    %cst_49 = arith.constant dense<0.000000e+00> : vector<16x64xf32>
    %107 = tpu.matmul %105, %106, %cst_49 {dimension_numbers = #tpu.dot_dimension_numbers<[1], [0], [0], [1], [0, 0, 1, 1], [], []>} : vector<16x32xf32>, vector<32x64xf32>, vector<16x64xf32> -> vector<16x64xf32>
    %c0_50 = arith.constant 0 : index
    %c768 = arith.constant 768 : index
    %108 = vector.load %arg2[%c0_50, %c768] : memref<32x1184xf32, #tpu.memory_space<vmem>>, vector<32x32xf32>
    %109 = vector.extract_strided_slice %1 {offsets = [10, 0], sizes = [1, 32], strides = [1, 1]} : vector<13x32xf32> to vector<1x32xf32>
    %cst_51 = arith.constant dense<0.000000e+00> : vector<64x64xf32>
    %110 = tpu.matmul %8, %107, %cst_51 {dimension_numbers = #tpu.dot_dimension_numbers<[1], [0], [0], [1], [0, 0, 1, 1], [], []>} : vector<64x16xf32>, vector<16x64xf32>, vector<64x64xf32> -> vector<64x64xf32>
    %111 = arith.mulf %110, %7 : vector<64x64xf32>
    %cst_52 = arith.constant dense<0.000000e+00> : vector<32x64xf32>
    %112 = tpu.matmul %104, %111, %cst_52 {dimension_numbers = #tpu.dot_dimension_numbers<[1], [1], [0], [0], [0, 0, 1, 0], [], []>} : vector<32x64xf32>, vector<64x64xf32>, vector<32x64xf32> -> vector<32x64xf32>
    %113 = arith.addf %112, %4 : vector<32x64xf32>
    %cst_53 = arith.constant dense<0xFF800000> : vector<32xf32>
    %114 = vector.multi_reduction <maximumf>, %113, %cst_53 [1] : vector<32x64xf32> to vector<32xf32>
    %115 = vector.shape_cast %114 : vector<32xf32> to vector<32x1xf32>
    %116 = vector.broadcast %115 : vector<32x1xf32> to vector<32x64xf32>
    %117 = arith.subf %113, %116 : vector<32x64xf32>
    %118 = math.exp %117 : vector<32x64xf32>
    %cst_54 = arith.constant dense<0.000000e+00> : vector<32x64xf32>
    %119 = tpu.matmul %118, %111, %cst_54 {dimension_numbers = #tpu.dot_dimension_numbers<[1], [0], [0], [1], [0, 0, 1, 1], [], []>} : vector<32x64xf32>, vector<64x64xf32>, vector<32x64xf32> -> vector<32x64xf32>
    %120 = vector.extract_strided_slice %7 {offsets = [0, 0], sizes = [64, 32], strides = [1, 1]} : vector<64x64xf32> to vector<64x32xf32>
    %cst_55 = arith.constant dense<0.000000e+00> : vector<32x32xf32>
    %121 = tpu.matmul %118, %120, %cst_55 {dimension_numbers = #tpu.dot_dimension_numbers<[1], [0], [0], [1], [0, 0, 1, 1], [], []>} : vector<32x64xf32>, vector<64x32xf32>, vector<32x32xf32> -> vector<32x32xf32>
    %122 = vector.extract_strided_slice %119 {offsets = [0, 0], sizes = [32, 32], strides = [1, 1]} : vector<32x64xf32> to vector<32x32xf32>
    %cst_56 = arith.constant 1.000000e-30 : f32
    %123 = vector.broadcast %cst_56 : f32 to vector<32x32xf32>
    %124 = arith.maximumf %121, %123 : vector<32x32xf32>
    %125 = tpu.reciprocal %124 {approx = true} : vector<32x32xf32> -> vector<32x32xf32>
    %126 = arith.mulf %122, %125 : vector<32x32xf32>
    %cst_57 = arith.constant dense<0.000000e+00> : vector<32x32xf32>
    %127 = tpu.matmul %126, %108, %cst_57 {dimension_numbers = #tpu.dot_dimension_numbers<[1], [0], [0], [1], [0, 0, 1, 1], [], []>} : vector<32x32xf32>, vector<32x32xf32>, vector<32x32xf32> -> vector<32x32xf32>
    %128 = vector.broadcast %109 : vector<1x32xf32> to vector<32x32xf32>
    %129 = arith.addf %127, %128 : vector<32x32xf32>
    %130 = arith.addf %129, %78 : vector<32x32xf32>
    %131 = vector.extract_strided_slice %1 {offsets = [7, 0], sizes = [1, 32], strides = [1, 1]} : vector<13x32xf32> to vector<1x32xf32>
    %132 = vector.extract_strided_slice %1 {offsets = [8, 0], sizes = [1, 32], strides = [1, 1]} : vector<13x32xf32> to vector<1x32xf32>
    %cst_58 = arith.constant dense<0.000000e+00> : vector<32xf32>
    %133 = vector.multi_reduction <add>, %130, %cst_58 [1] : vector<32x32xf32> to vector<32xf32>
    %134 = vector.shape_cast %133 : vector<32xf32> to vector<32x1xf32>
    %cst_59 = arith.constant 3.200000e+01 : f32
    %135 = vector.broadcast %cst_59 : f32 to vector<32x1xf32>
    %136 = arith.divf %134, %135 : vector<32x1xf32>
    %137 = vector.broadcast %136 : vector<32x1xf32> to vector<32x32xf32>
    %138 = arith.subf %130, %137 : vector<32x32xf32>
    %139 = arith.mulf %138, %138 : vector<32x32xf32>
    %cst_60 = arith.constant dense<0.000000e+00> : vector<32xf32>
    %140 = vector.multi_reduction <add>, %139, %cst_60 [1] : vector<32x32xf32> to vector<32xf32>
    %141 = vector.shape_cast %140 : vector<32xf32> to vector<32x1xf32>
    %cst_61 = arith.constant 3.200000e+01 : f32
    %142 = vector.broadcast %cst_61 : f32 to vector<32x1xf32>
    %143 = arith.divf %141, %142 : vector<32x1xf32>
    %144 = vector.broadcast %136 : vector<32x1xf32> to vector<32x32xf32>
    %145 = arith.subf %130, %144 : vector<32x32xf32>
    %cst_62 = arith.constant 9.99999974E-6 : f32
    %146 = vector.broadcast %cst_62 : f32 to vector<32x1xf32>
    %147 = arith.addf %143, %146 : vector<32x1xf32>
    %148 = math.rsqrt %147 : vector<32x1xf32>
    %149 = vector.broadcast %148 : vector<32x1xf32> to vector<32x32xf32>
    %150 = arith.mulf %145, %149 : vector<32x32xf32>
    %151 = vector.broadcast %131 : vector<1x32xf32> to vector<32x32xf32>
    %152 = arith.mulf %150, %151 : vector<32x32xf32>
    %153 = vector.broadcast %132 : vector<1x32xf32> to vector<32x32xf32>
    %154 = arith.addf %152, %153 : vector<32x32xf32>
    %c0_63 = arith.constant 0 : index
    %c896 = arith.constant 896 : index
    %155 = vector.load %arg2[%c0_63, %c896] : memref<32x1184xf32, #tpu.memory_space<vmem>>, vector<32x256xf32>
    %cst_64 = arith.constant dense<0.000000e+00> : vector<32x256xf32>
    %156 = tpu.matmul %154, %155, %cst_64 {dimension_numbers = #tpu.dot_dimension_numbers<[1], [0], [0], [1], [0, 0, 1, 1], [], []>} : vector<32x32xf32>, vector<32x256xf32>, vector<32x256xf32> -> vector<32x256xf32>
    %c0_65 = arith.constant 0 : index
    %c0_66 = arith.constant 0 : index
    %157 = vector.load %arg5[%c0_65, %c0_66] : memref<1x256xf32, #tpu.memory_space<vmem>>, vector<1x256xf32>
    %158 = vector.broadcast %157 : vector<1x256xf32> to vector<32x256xf32>
    %159 = arith.addf %156, %158 : vector<32x256xf32>
    %160 = vector.extract_strided_slice %159 {offsets = [0, 0], sizes = [32, 128], strides = [1, 1]} : vector<32x256xf32> to vector<32x128xf32>
    %161 = vector.extract_strided_slice %159 {offsets = [0, 128], sizes = [32, 128], strides = [1, 1]} : vector<32x256xf32> to vector<32x128xf32>
    %cst_67 = arith.constant 5.000000e-01 : f32
    %162 = vector.broadcast %cst_67 : f32 to vector<32x128xf32>
    %163 = arith.mulf %162, %161 : vector<32x128xf32>
    %cst_68 = arith.constant 0.707106769 : f32
    %164 = vector.broadcast %cst_68 : f32 to vector<32x128xf32>
    %165 = arith.mulf %161, %164 : vector<32x128xf32>
    %166 = math.erf %165 : vector<32x128xf32>
    %cst_69 = arith.constant 1.000000e+00 : f32
    %167 = vector.broadcast %cst_69 : f32 to vector<32x128xf32>
    %168 = arith.addf %167, %166 : vector<32x128xf32>
    %169 = arith.mulf %163, %168 : vector<32x128xf32>
    %170 = arith.mulf %160, %169 : vector<32x128xf32>
    %c0_70 = arith.constant 0 : index
    %c0_71 = arith.constant 0 : index
    %171 = vector.load %arg3[%c0_70, %c0_71] : memref<128x32xf32, #tpu.memory_space<vmem>>, vector<128x32xf32>
    %cst_72 = arith.constant dense<0.000000e+00> : vector<32x32xf32>
    %172 = tpu.matmul %170, %171, %cst_72 {dimension_numbers = #tpu.dot_dimension_numbers<[1], [0], [0], [1], [0, 0, 1, 1], [], []>} : vector<32x128xf32>, vector<128x32xf32>, vector<32x32xf32> -> vector<32x32xf32>
    %173 = vector.extract_strided_slice %1 {offsets = [11, 0], sizes = [1, 32], strides = [1, 1]} : vector<13x32xf32> to vector<1x32xf32>
    %174 = vector.broadcast %173 : vector<1x32xf32> to vector<32x32xf32>
    %175 = arith.addf %172, %174 : vector<32x32xf32>
    %176 = arith.addf %175, %130 : vector<32x32xf32>
    %c0_73 = arith.constant 0 : index
    %c1152 = arith.constant 1152 : index
    %177 = vector.load %arg2[%c0_73, %c1152] : memref<32x1184xf32, #tpu.memory_space<vmem>>, vector<32x32xf32>
    %cst_74 = arith.constant dense<0.000000e+00> : vector<32x32xf32>
    %178 = tpu.matmul %176, %177, %cst_74 {dimension_numbers = #tpu.dot_dimension_numbers<[1], [0], [0], [1], [0, 0, 1, 1], [], []>} : vector<32x32xf32>, vector<32x32xf32>, vector<32x32xf32> -> vector<32x32xf32>
    %179 = vector.extract_strided_slice %1 {offsets = [12, 0], sizes = [1, 32], strides = [1, 1]} : vector<13x32xf32> to vector<1x32xf32>
    %180 = vector.broadcast %179 : vector<1x32xf32> to vector<32x32xf32>
    %181 = arith.addf %178, %180 : vector<32x32xf32>
    %182 = arith.addf %181, %0 : vector<32x32xf32>
    %c0_75 = arith.constant 0 : index
    %c0_76 = arith.constant 0 : index
    %183 = vector.load %arg9[%c0_75, %c0_76] : memref<32x32xf32, #tpu.memory_space<vmem>>, vector<32x32xf32>
    tpu.vector_store %arg9[%c0_75, %c0_76], %182 {strides = array<i32>} : memref<32x32xf32, #tpu.memory_space<vmem>>, vector<32x32xf32>,
    return
  }
}

</mosaic_0001>

<llo_original>
// kernel: spatial_transformer.1
$region0: #{spatial_transformer.1}
  #allocation0 [shape = 'u32[]', space=smem, size = 0x4, offset = 0x4, fixed_abs, tag = 'smem constant byte address 0x4 - core index']
  #allocation1 [shape = 'u32[144,128]{1,0:T(1,128)}', space=vmem, size = 0x12000, scoped, tag = 'internal scratch']
  %s0 = inlined_call_operand.hbm [shape: f32[32,32], index: 0, kind: input, shape index: {}]
  %s1 = inlined_call_operand.hbm [shape: f32[16,32], index: 1, kind: input, shape index: {}]
  %s2 = inlined_call_operand.vmem [shape: f32[32,1184], index: 2, kind: input, shape index: {}]
  %s3 = inlined_call_operand.vmem [shape: f32[128,32], index: 3, kind: input, shape index: {}]
  %s4 = inlined_call_operand.hbm [shape: f32[13,32], index: 4, kind: input, shape index: {}]
  %s5 = inlined_call_operand.vmem [shape: f32[1,256], index: 5, kind: input, shape index: {}]
  %s6 = inlined_call_operand.hbm [shape: f32[32,320], index: 6, kind: input, shape index: {}]
  %s7 = inlined_call_operand.vmem [shape: f32[128,160], index: 7, kind: input, shape index: {}]
  %s8 = inlined_call_operand.vmem [shape: f32[64,144], index: 8, kind: input, shape index: {}]
  %s9 = inlined_call_operand.hbm [shape: f32[32,32], index: 9, kind: output, shape index: {}]
  %s10 = sld [smem:[#allocation0]]
  $region62: #{spatial_transformer.1} parent=0
    _
  %s12 = ssub.s32 1, %s10
  %s13 = scalar_select 0, %s12, %s10
  $region1: #{spatial_transformer.1} parent=0
    #allocation2 [shape = 'u8[16384]{0}', space=vmem, size = 0x4000, scoped, tag = 'input window, operand 0, single buffered']
    #allocation3 [shape = 's32[1]{0}', space=sflag, size = 0x4, scoped, tag = 'scoped memory for spatial_transformer.1']
    #allocation4 [shape = 's32[1]{0}', space=sflag, size = 0x4, scoped, tag = 'scoped memory for spatial_transformer.1']
    #allocation5 [shape = 'u8[8192]{0}', space=vmem, size = 0x2000, scoped, tag = 'input window, operand 1, single buffered']
    #allocation6 [shape = 's32[1]{0}', space=sflag, size = 0x4, scoped, tag = 'scoped memory for spatial_transformer.1']
    #allocation7 [shape = 'u8[8192]{0}', space=vmem, size = 0x2000, scoped, tag = 'input window, operand 4, single buffered']
    #allocation8 [shape = 'u8[49152]{0}', space=vmem, size = 0xc000, scoped, tag = 'input window, operand 6, single buffered']
    #allocation9 [shape = 's32[1]{0}', space=sflag, size = 0x4, scoped, tag = 'scoped memory for spatial_transformer.1']
    #allocation10 [shape = 'u8[16384]{0}', space=vmem, size = 0x4000, scoped, tag = 'output window, operand 0, single buffered']
    %14 = vsyncpa [#allocation3], 0
    %15 = vsyncpa [#allocation6], 0
    %16 = vsyncpa [#allocation9], 0
    %17 = vsyncpa [#allocation4], 0
    // Predicated region
    $region2: #{spatial_transformer.1} parent=1 // pred_check
      _
    $region3: #{spatial_transformer.1} parent=1 // pred_check_branch
      %19 = sbr.rel (0) target = $region5
    $region4: #{spatial_transformer.1} parent=1 // pred_region
      %s21 = ssub.s32 512, 512
      %22 = vsyncadd [#allocation3], %s21
      %s23 = sshll.u32 [#allocation2], 4
      %s24 = int_to_ptr.vmem [resolvable:$true] %s23
      %29 = dma.hbm_to_vmem [thread:$0]  %s0, 512, %s24, [#allocation3], 128, 128, 8
    $region5: #{spatial_transformer.1} parent=1 // pred_fallthru
      _
    // Predicated region
    $region6: #{spatial_transformer.1} parent=1 // pred_check
      _
    $region7: #{spatial_transformer.1} parent=1 // pred_check_branch
      %31 = sbr.rel (0) target = $region9
    $region8: #{spatial_transformer.1} parent=1 // pred_region
      %s33 = ssub.s32 256, 256
      %34 = vsyncadd [#allocation6], %s33
      %s35 = sshll.u32 [#allocation5], 4
      %s36 = int_to_ptr.vmem [resolvable:$true] %s35
      %41 = dma.hbm_to_vmem [thread:$0]  %s1, 256, %s36, [#allocation6], 128, 128, 8
    $region9: #{spatial_transformer.1} parent=1 // pred_fallthru
      _
    // Predicated region
    $region10: #{spatial_transformer.1} parent=1 // pred_check
      _
    $region11: #{spatial_transformer.1} parent=1 // pred_check_branch
      %43 = sbr.rel (0) target = $region13
    $region12: #{spatial_transformer.1} parent=1 // pred_region
      _
    $region13: #{spatial_transformer.1} parent=1 // pred_fallthru
      _
    // Predicated region
    $region14: #{spatial_transformer.1} parent=1 // pred_check
      _
    $region15: #{spatial_transformer.1} parent=1 // pred_check_branch
      %45 = sbr.rel (0) target = $region17
    $region16: #{spatial_transformer.1} parent=1 // pred_region
      _
    $region17: #{spatial_transformer.1} parent=1 // pred_fallthru
      _
    // Predicated region
    $region18: #{spatial_transformer.1} parent=1 // pred_check
      _
    $region19: #{spatial_transformer.1} parent=1 // pred_check_branch
      %47 = sbr.rel (0) target = $region21
    $region20: #{spatial_transformer.1} parent=1 // pred_region
      %s49 = ssub.s32 256, 256
      %50 = vsyncadd [#allocation6], %s49
      %s51 = sshll.u32 [#allocation7], 4
      %s52 = int_to_ptr.vmem [resolvable:$true] %s51
      %57 = dma.hbm_to_vmem [thread:$0]  %s4, 256, %s52, [#allocation6], 128, 128, 8
    $region21: #{spatial_transformer.1} parent=1 // pred_fallthru
      _
    // Predicated region
    $region22: #{spatial_transformer.1} parent=1 // pred_check
      _
    $region23: #{spatial_transformer.1} parent=1 // pred_check_branch
      %59 = sbr.rel (0) target = $region25
    $region24: #{spatial_transformer.1} parent=1 // pred_region
      _
    $region25: #{spatial_transformer.1} parent=1 // pred_fallthru
      _
    // Predicated region
    $region26: #{spatial_transformer.1} parent=1 // pred_check
      _
    $region27: #{spatial_transformer.1} parent=1 // pred_check_branch
      %61 = sbr.rel (0) target = $region29
    $region28: #{spatial_transformer.1} parent=1 // pred_region
      %s63 = ssub.s32 1536, 1536
      %64 = vsyncadd [#allocation9], %s63
      %s65 = sshll.u32 [#allocation8], 4
      %s66 = int_to_ptr.vmem [resolvable:$true] %s65
      %71 = dma.hbm_to_vmem [thread:$0]  %s6, 1536, %s66, [#allocation9], 384, 384, 24
    $region29: #{spatial_transformer.1} parent=1 // pred_fallthru
      _
    // Predicated region
    $region30: #{spatial_transformer.1} parent=1 // pred_check
      _
    $region31: #{spatial_transformer.1} parent=1 // pred_check_branch
      %73 = sbr.rel (0) target = $region33
    $region32: #{spatial_transformer.1} parent=1 // pred_region
      _
    $region33: #{spatial_transformer.1} parent=1 // pred_fallthru
      _
    // Predicated region
    $region34: #{spatial_transformer.1} parent=1 // pred_check
      _
    $region35: #{spatial_transformer.1} parent=1 // pred_check_branch
      %75 = sbr.rel (0) target = $region37
    $region36: #{spatial_transformer.1} parent=1 // pred_region
      _
    $region37: #{spatial_transformer.1} parent=1 // pred_fallthru
      _
    // Predicated region
    $region38: #{spatial_transformer.1} parent=1 // pred_check
      _
    $region39: #{spatial_transformer.1} parent=1 // pred_check_branch
      %77 = sbr.rel (0) target = $region41
    $region40: #{spatial_transformer.1} parent=1 // pred_region
      %78 = dma.done [#allocation3], 512
    $region41: #{spatial_transformer.1} parent=1 // pred_fallthru
      _
    // Predicated region
    $region42: #{spatial_transformer.1} parent=1 // pred_check
      _
    $region43: #{spatial_transformer.1} parent=1 // pred_check_branch
      %80 = sbr.rel (0) target = $region45
    $region44: #{spatial_transformer.1} parent=1 // pred_region
      %81 = dma.done [#allocation6], 256
    $region45: #{spatial_transformer.1} parent=1 // pred_fallthru
      _
    // Predicated region
    $region46: #{spatial_transformer.1} parent=1 // pred_check
      _
    $region47: #{spatial_transformer.1} parent=1 // pred_check_branch
      %83 = sbr.rel (0) target = $region49
    $region48: #{spatial_transformer.1} parent=1 // pred_region
      %84 = dma.done [#allocation6], 256
    $region49: #{spatial_transformer.1} parent=1 // pred_fallthru
      _
    // Predicated region
    $region50: #{spatial_transformer.1} parent=1 // pred_check
      _
    $region51: #{spatial_transformer.1} parent=1 // pred_check_branch
      %86 = sbr.rel (0) target = $region53
    $region52: #{spatial_transformer.1} parent=1 // pred_region
      %87 = dma.done [#allocation9], 1536
    $region53: #{spatial_transformer.1} parent=1 // pred_fallthru
      _
    %v88 = vld [vmem:[#allocation2] sm:$0xff]
    %v89 = vld [vmem:[#allocation2 + $0x8] sm:$0xff]
    %v90 = vld [vmem:[#allocation2 + $0x10] sm:$0xff]
    %v91 = vld [vmem:[#allocation2 + $0x18] sm:$0xff]
    %v92 = vld [vmem:[#allocation7] sm:$0xff]
    %v93 = vld [vmem:[#allocation7 + $0x8] sm:$0x1f]
    %v94 = vld [vmem:[#allocation8] sm:$0xff]
    %v95 = vld [vmem:[#allocation8 + $0x18] sm:$0xff]
    %v96 = vld [vmem:[#allocation8 + $0x30] sm:$0xff]
    %v97 = vld [vmem:[#allocation8 + $0x48] sm:$0xff]
    %v98 = vld [vmem:[#allocation8 + $0x8] sm:$0xff]
    %v99 = vld [vmem:[#allocation8 + $0x20] sm:$0xff]
    %v100 = vld [vmem:[#allocation8 + $0x38] sm:$0xff]
    %v101 = vld [vmem:[#allocation8 + $0x50] sm:$0xff]
    %v102 = vld [vmem:[#allocation8 + $0x10] sm:$0xff]
    %v103 = vld [vmem:[#allocation8 + $0x28] sm:$0xff]
    %v104 = vld [vmem:[#allocation8 + $0x40] sm:$0xff]
    %v105 = vld [vmem:[#allocation8 + $0x58] sm:$0xff]
    %v106 = vld [vmem:[%s7] sm:$0xff]
    %v107 = vld [vmem:[%s7 + $0x10] sm:$0xff]
    %v108 = vld [vmem:[%s7 + $0x20] sm:$0xff]
    %v109 = vld [vmem:[%s7 + $0x30] sm:$0xff]
    %v110 = vld [vmem:[%s7 + $0x40] sm:$0xff]
    %v111 = vld [vmem:[%s7 + $0x50] sm:$0xff]
    %v112 = vld [vmem:[%s7 + $0x60] sm:$0xff]
    %v113 = vld [vmem:[%s7 + $0x70] sm:$0xff]
    %v114 = vld [vmem:[%s7 + $0x80] sm:$0xff]
    %v115 = vld [vmem:[%s7 + $0x90] sm:$0xff]
    %v116 = vld [vmem:[%s7 + $0xa0] sm:$0xff]
    %v117 = vld [vmem:[%s7 + $0xb0] sm:$0xff]
    %v118 = vld [vmem:[%s7 + $0xc0] sm:$0xff]
    %v119 = vld [vmem:[%s7 + $0xd0] sm:$0xff]
    %v120 = vld [vmem:[%s7 + $0xe0] sm:$0xff]
    %v121 = vld [vmem:[%s7 + $0xf0] sm:$0xff]
    %v122 = vld [vmem:[%s7 + $0x8] sm:$0xff]
    %v123 = vld [vmem:[%s7 + $0x18] sm:$0xff]
    %v124 = vld [vmem:[%s7 + $0x28] sm:$0xff]
    %v125 = vld [vmem:[%s7 + $0x38] sm:$0xff]
    %v126 = vld [vmem:[%s7 + $0x48] sm:$0xff]
    %v127 = vld [vmem:[%s7 + $0x58] sm:$0xff]
    %v128 = vld [vmem:[%s7 + $0x68] sm:$0xff]
    %v129 = vld [vmem:[%s7 + $0x78] sm:$0xff]
    %v130 = vld [vmem:[%s7 + $0x88] sm:$0xff]
    %v131 = vld [vmem:[%s7 + $0x98] sm:$0xff]
    %v132 = vld [vmem:[%s7 + $0xa8] sm:$0xff]
    %v133 = vld [vmem:[%s7 + $0xb8] sm:$0xff]
    %v134 = vld [vmem:[%s7 + $0xc8] sm:$0xff]
    %v135 = vld [vmem:[%s7 + $0xd8] sm:$0xff]
    %v136 = vld [vmem:[%s7 + $0xe8] sm:$0xff]
    %v137 = vld [vmem:[%s7 + $0xf8] sm:$0xff]
    %v138 = vld [vmem:[%s8] sm:$0xff]
    %v139 = vld [vmem:[%s8 + $0x10] sm:$0xff]
    %v140 = vld [vmem:[%s8 + $0x20] sm:$0xff]
    %v141 = vld [vmem:[%s8 + $0x30] sm:$0xff]
    %v142 = vld [vmem:[%s8 + $0x40] sm:$0xff]
    %v143 = vld [vmem:[%s8 + $0x50] sm:$0xff]
    %v144 = vld [vmem:[%s8 + $0x60] sm:$0xff]
    %v145 = vld [vmem:[%s8 + $0x70] sm:$0xff]
    %v146 = vld [vmem:[%s8 + $0x8] sm:$0xff]
    %v147 = vld [vmem:[%s8 + $0x18] sm:$0xff]
    %v148 = vld [vmem:[%s8 + $0x28] sm:$0xff]
    %v149 = vld [vmem:[%s8 + $0x38] sm:$0xff]
    %v150 = vld [vmem:[%s8 + $0x48] sm:$0xff]
    %v151 = vld [vmem:[%s8 + $0x58] sm:$0xff]
    %v152 = vld [vmem:[%s8 + $0x68] sm:$0xff]
    %v153 = vld [vmem:[%s8 + $0x78] sm:$0xff]
    %vm154 = vcmask 261120
    %v156 = vsel %vm154, %v94, 0
    %v159 = vsel %vm154, %v95, 0
    %v162 = vsel %vm154, %v96, 0
    %v165 = vsel %vm154, %v97, 0
    %167 = vmatprep.subr.mxu0 0.0
    %168 = vmatpush1.msra.mxu0 %v88
    %169 = vmatprep.subr.mxu0 0.0
    %170 = vmatpush1.msra.mxu0 %v89
    %171 = vmatprep.subr.mxu0 0.0
    %172 = vmatpush1.msra.mxu0 %v90
    %173 = vmatprep.subr.mxu0 0.0
    %174 = vmatpush1.msra.mxu0 %v91
    %175 = vmatprep.subr.mxu0 0.0
    %176 = vmatpush1.msra.mxu0 0.0
    %177 = vmatprep.subr.mxu0 0.0
    %178 = vmatpush1.msra.mxu0 0.0
    %179 = vmatprep.subr.mxu0 0.0
    %180 = vmatpush1.msra.mxu0 0.0
    %181 = vmatprep.subr.mxu0 0.0
    %182 = vmatpush1.msra.mxu0 0.0
    %183 = vmatprep.subr.mxu0 0.0
    %184 = vmatpush1.msra.mxu0 0.0
    %185 = vmatprep.subr.mxu0 0.0
    %186 = vmatpush1.msra.mxu0 0.0
    %187 = vmatprep.subr.mxu0 0.0
    %188 = vmatpush1.msra.mxu0 0.0
    %189 = vmatprep.subr.mxu0 0.0
    %190 = vmatpush1.msra.mxu0 0.0
    %191 = vmatprep.subr.mxu0 0.0
    %192 = vmatpush1.msra.mxu0 0.0
    %193 = vmatprep.subr.mxu0 0.0
    %194 = vmatpush1.msra.mxu0 0.0
    %195 = vmatprep.subr.mxu0 0.0
    %196 = vmatpush1.msra.mxu0 0.0
    %197 = vmatprep.subr.mxu0 0.0
    %198 = vmatpush1.msra.mxu0 0.0
    %199 = vmatprep.subr.mxu0 0.0
    %200 = vmatpush1.msra.mxu0 0.0
    %201 = vmatprep.subr.mxu0 0.0
    %202 = vmatpush1.msra.mxu0 0.0
    %203 = vmatprep.subr.mxu0 0.0
    %204 = vmatpush1.msra.mxu0 0.0
    %205 = vmatprep.subr.mxu0 0.0
    %206 = vmatpush1.msra.mxu0 0.0
    %207 = vmatprep.subr.mxu0 0.0
    %208 = vmatpush1.msra.mxu0 0.0
    %209 = vmatprep.subr.mxu0 0.0
    %210 = vmatpush1.msra.mxu0 0.0
    %211 = vmatprep.subr.mxu0 0.0
    %212 = vmatpush1.msra.mxu0 0.0
    %213 = vmatprep.subr.mxu0 0.0
    %214 = vmatpush1.msra.mxu0 0.0
    %215 = vmatprep.subr.mxu0 0.0
    %216 = vmatpush1.msra.mxu0 0.0
    %217 = vmatprep.subr.mxu0 0.0
    %218 = vmatpush1.msra.mxu0 0.0
    %219 = vmatprep.subr.mxu0 0.0
    %220 = vmatpush1.msra.mxu0 0.0
    %221 = vmatprep.subr.mxu0 0.0
    %222 = vmatpush1.msra.mxu0 0.0
    %223 = vmatprep.subr.mxu0 0.0
    %224 = vmatpush1.msra.mxu0 0.0
    %225 = vmatprep.subr.mxu0 0.0
    %226 = vmatpush1.msra.mxu0 0.0
    %227 = vmatprep.subr.mxu0 0.0
    %228 = vmatpush1.msra.mxu0 0.0
    %229 = vmatprep.subr.mxu0 0.0
    %230 = vmatpush1.msra.mxu0 0.0
    %231 = vmatprep.mubr.f32.mxu0 0.0
    %232 = vmatmul.mubr.f32.gmra.mrb[0].mxu0 %v156
    %v233 = vpop.f32.mrb[0].mxu0
    %v234 = vadd.f32 0.0, %v233
    %v235 = vpop.f32.mrb[0].mxu0
    %236 = vmatprep.mubr.f32.mxu0 0.0
    %237 = vmatmul.mubr.f32.gmra.mrb[0].mxu0 %v159
    %v238 = vpop.f32.mrb[0].mxu0
    %v239 = vadd.f32 0.0, %v238
    %v240 = vpop.f32.mrb[0].mxu0
    %241 = vmatprep.mubr.f32.mxu0 0.0
    %242 = vmatmul.mubr.f32.gmra.mrb[0].mxu0 %v162
    %v243 = vpop.f32.mrb[0].mxu0
    %v244 = vadd.f32 0.0, %v243
    %v245 = vpop.f32.mrb[0].mxu0
    %246 = vmatprep.mubr.f32.mxu0 0.0
    %247 = vmatmul.mubr.f32.gmra.mrb[0].mxu0 %v165
    %v248 = vpop.f32.mrb[0].mxu0
    %v249 = vadd.f32 0.0, %v248
    %v250 = vpop.f32.mrb[0].mxu0
    %251 = vdwg.mxu0
    %v252 = vsub.f32 %v88, %v234
    %v253 = vsub.f32 %v89, %v239
    %v254 = vsub.f32 %v90, %v244
    %v255 = vsub.f32 %v91, %v249
    %v256 = vmul.f32 %v252, %v252
    %v257 = vmul.f32 %v253, %v253
    %v258 = vmul.f32 %v254, %v254
    %v259 = vmul.f32 %v255, %v255
    %260 = vmatprep.subr.mxu0 0.0
    %261 = vmatpush1.msra.mxu0 %v256
    %262 = vmatprep.subr.mxu0 0.0
    %263 = vmatpush1.msra.mxu0 %v257
    %264 = vmatprep.subr.mxu0 0.0
    %265 = vmatpush1.msra.mxu0 %v258
    %266 = vmatprep.subr.mxu0 0.0
    %267 = vmatpush1.msra.mxu0 %v259
    %268 = vmatprep.subr.mxu0 0.0
    %269 = vmatpush1.msra.mxu0 0.0
    %270 = vmatprep.subr.mxu0 0.0
    %271 = vmatpush1.msra.mxu0 0.0
    %272 = vmatprep.subr.mxu0 0.0
    %273 = vmatpush1.msra.mxu0 0.0
    %274 = vmatprep.subr.mxu0 0.0
    %275 = vmatpush1.msra.mxu0 0.0
    %276 = vmatprep.subr.mxu0 0.0
    %277 = vmatpush1.msra.mxu0 0.0
    %278 = vmatprep.subr.mxu0 0.0
    %279 = vmatpush1.msra.mxu0 0.0
    %280 = vmatprep.subr.mxu0 0.0
    %281 = vmatpush1.msra.mxu0 0.0
    %282 = vmatprep.subr.mxu0 0.0
    %283 = vmatpush1.msra.mxu0 0.0
    %284 = vmatprep.subr.mxu0 0.0
    %285 = vmatpush1.msra.mxu0 0.0
    %286 = vmatprep.subr.mxu0 0.0
    %287 = vmatpush1.msra.mxu0 0.0
    %288 = vmatprep.subr.mxu0 0.0
    %289 = vmatpush1.msra.mxu0 0.0
    %290 = vmatprep.subr.mxu0 0.0
    %291 = vmatpush1.msra.mxu0 0.0
    %292 = vmatprep.subr.mxu0 0.0
    %293 = vmatpush1.msra.mxu0 0.0
    %294 = vmatprep.subr.mxu0 0.0
    %295 = vmatpush1.msra.mxu0 0.0
    %296 = vmatprep.subr.mxu0 0.0
    %297 = vmatpush1.msra.mxu0 0.0
    %298 = vmatprep.subr.mxu0 0.0
    %299 = vmatpush1.msra.mxu0 0.0
    %300 = vmatprep.subr.mxu0 0.0
    %301 = vmatpush1.msra.mxu0 0.0
    %302 = vmatprep.subr.mxu0 0.0
    %303 = vmatpush1.msra.mxu0 0.0
    %304 = vmatprep.subr.mxu0 0.0
    %305 = vmatpush1.msra.mxu0 0.0
    %306 = vmatprep.subr.mxu0 0.0
    %307 = vmatpush1.msra.mxu0 0.0
    %308 = vmatprep.subr.mxu0 0.0
    %309 = vmatpush1.msra.mxu0 0.0
    %310 = vmatprep.subr.mxu0 0.0
    %311 = vmatpush1.msra.mxu0 0.0
    %312 = vmatprep.subr.mxu0 0.0
    %313 = vmatpush1.msra.mxu0 0.0
    %314 = vmatprep.subr.mxu0 0.0
    %315 = vmatpush1.msra.mxu0 0.0
    %316 = vmatprep.subr.mxu0 0.0
    %317 = vmatpush1.msra.mxu0 0.0
    %318 = vmatprep.subr.mxu0 0.0
    %319 = vmatpush1.msra.mxu0 0.0
    %320 = vmatprep.subr.mxu0 0.0
    %321 = vmatpush1.msra.mxu0 0.0
    %322 = vmatprep.subr.mxu0 0.0
    %323 = vmatpush1.msra.mxu0 0.0
    %324 = vmatprep.mubr.f32.mxu0 0.0
    %325 = vmatmul.mubr.f32.gmra.mrb[0].mxu0 %v156
    %v326 = vpop.f32.mrb[0].mxu0
    %v327 = vadd.f32 1e-06, %v326
    %v328 = vpop.f32.mrb[0].mxu0
    %329 = vmatprep.mubr.f32.mxu0 0.0
    %330 = vmatmul.mubr.f32.gmra.mrb[0].mxu0 %v159
    %v331 = vpop.f32.mrb[0].mxu0
    %v332 = vadd.f32 1e-06, %v331
    %v333 = vpop.f32.mrb[0].mxu0
    %334 = vmatprep.mubr.f32.mxu0 0.0
    %335 = vmatmul.mubr.f32.gmra.mrb[0].mxu0 %v162
    %v336 = vpop.f32.mrb[0].mxu0
    %v337 = vadd.f32 1e-06, %v336
    %v338 = vpop.f32.mrb[0].mxu0
    %339 = vmatprep.mubr.f32.mxu0 0.0
    %340 = vmatmul.mubr.f32.gmra.mrb[0].mxu0 %v165
    %v341 = vpop.f32.mrb[0].mxu0
    %v342 = vadd.f32 1e-06, %v341
    %v343 = vpop.f32.mrb[0].mxu0
    %344 = vdwg.mxu0
    %v345 = vrsqrt.pop %v327
    %v346 = vrsqrt.pop %v332
    %v347 = vrsqrt.pop %v337
    %v348 = vrsqrt.pop %v342
    %v349 = vmul.f32 %v252, %v345
    %v350 = vmul.f32 %v253, %v346
    %v351 = vmul.f32 %v254, %v347
    %v352 = vmul.f32 %v255, %v348
    %v353 = vlaneseq
    %v354 = vshrl.u32 %v353, 7
    %v355 = vsub.s32 0, %v354
    %v356 = vrot.slane %v92, %v355
    %v357 = vmul.f32 %v349, %v356
    %v358 = vmul.f32 %v350, %v356
    %v359 = vmul.f32 %v351, %v356
    %v360 = vmul.f32 %v352, %v356
    %v361 = vlaneseq
    %v362 = vshrl.u32 %v361, 7
    %v363 = vsub.s32 1, %v362
    %v364 = vrot.slane %v92, %v363
    %v365 = vadd.f32 %v357, %v364
    %v366 = vadd.f32 %v358, %v364
    %v367 = vadd.f32 %v359, %v364
    %v368 = vadd.f32 %v360, %v364
    %v369 = vld [vmem:[%s2] sm:$0xff]
    %v370 = vld [vmem:[%s2 + $0x50] sm:$0xff]
    %v371 = vld [vmem:[%s2 + $0xa0] sm:$0xff]
    %v372 = vld [vmem:[%s2 + $0xf0] sm:$0xff]
    %v373 = vlaneseq
    %v374 = vshrl.u32 %v373, 7
    %v375 = vsub.s32 2, %v374
    %v376 = vrot.slane %v92, %v375
    %v378 = vsel %vm154, %v365, 0
    %v381 = vsel %vm154, %v366, 0
    %v384 = vsel %vm154, %v367, 0
    %v387 = vsel %vm154, %v368, 0
    %389 = vmatprep.subr.mxu0 0.0
    %390 = vmatpush1.msra.mxu0 %v369
    %391 = vmatprep.subr.mxu0 0.0
    %392 = vmatpush1.msra.mxu0 %v370
    %393 = vmatprep.subr.mxu0 0.0
    %394 = vmatpush1.msra.mxu0 %v371
    %395 = vmatprep.subr.mxu0 0.0
    %396 = vmatpush1.msra.mxu0 %v372
    %397 = vmatprep.subr.mxu0 0.0
    %398 = vmatpush1.msra.mxu0 0.0
    %399 = vmatprep.subr.mxu0 0.0
    %400 = vmatpush1.msra.mxu0 0.0
    %401 = vmatprep.subr.mxu0 0.0
    %402 = vmatpush1.msra.mxu0 0.0
    %403 = vmatprep.subr.mxu0 0.0
    %404 = vmatpush1.msra.mxu0 0.0
    %405 = vmatprep.subr.mxu0 0.0
    %406 = vmatpush1.msra.mxu0 0.0
    %407 = vmatprep.subr.mxu0 0.0
    %408 = vmatpush1.msra.mxu0 0.0
    %409 = vmatprep.subr.mxu0 0.0
    %410 = vmatpush1.msra.mxu0 0.0
    %411 = vmatprep.subr.mxu0 0.0
    %412 = vmatpush1.msra.mxu0 0.0
    %413 = vmatprep.subr.mxu0 0.0
    %414 = vmatpush1.msra.mxu0 0.0
    %415 = vmatprep.subr.mxu0 0.0
    %416 = vmatpush1.msra.mxu0 0.0
    %417 = vmatprep.subr.mxu0 0.0
    %418 = vmatpush1.msra.mxu0 0.0
    %419 = vmatprep.subr.mxu0 0.0
    %420 = vmatpush1.msra.mxu0 0.0
    %421 = vmatprep.subr.mxu0 0.0
    %422 = vmatpush1.msra.mxu0 0.0
    %423 = vmatprep.subr.mxu0 0.0
    %424 = vmatpush1.msra.mxu0 0.0
    %425 = vmatprep.subr.mxu0 0.0
    %426 = vmatpush1.msra.mxu0 0.0
    %427 = vmatprep.subr.mxu0 0.0
    %428 = vmatpush1.msra.mxu0 0.0
    %429 = vmatprep.subr.mxu0 0.0
    %430 = vmatpush1.msra.mxu0 0.0
    %431 = vmatprep.subr.mxu0 0.0
    %432 = vmatpush1.msra.mxu0 0.0
    %433 = vmatprep.subr.mxu0 0.0
    %434 = vmatpush1.msra.mxu0 0.0
    %435 = vmatprep.subr.mxu0 0.0
    %436 = vmatpush1.msra.mxu0 0.0
    %437 = vmatprep.subr.mxu0 0.0
    %438 = vmatpush1.msra.mxu0 0.0
    %439 = vmatprep.subr.mxu0 0.0
    %440 = vmatpush1.msra.mxu0 0.0
    %441 = vmatprep.subr.mxu0 0.0
    %442 = vmatpush1.msra.mxu0 0.0
    %443 = vmatprep.subr.mxu0 0.0
    %444 = vmatpush1.msra.mxu0 0.0
    %445 = vmatprep.subr.mxu0 0.0
    %446 = vmatpush1.msra.mxu0 0.0
    %447 = vmatprep.subr.mxu0 0.0
    %448 = vmatpush1.msra.mxu0 0.0
    %449 = vmatprep.subr.mxu0 0.0
    %450 = vmatpush1.msra.mxu0 0.0
    %451 = vmatprep.subr.mxu0 0.0
    %452 = vmatpush1.msra.mxu0 0.0
    %453 = vmatprep.mubr.f32.mxu0 0.0
    %454 = vmatmul.mubr.f32.gmra.mrb[0].mxu0 %v378
    %v455 = vpop.f32.mrb[0].mxu0
    %v456 = vadd.f32 %v376, %v455
    %v457 = vpop.f32.mrb[0].mxu0
    %458 = vmatprep.mubr.f32.mxu0 0.0
    %459 = vmatmul.mubr.f32.gmra.mrb[0].mxu0 %v381
    %v460 = vpop.f32.mrb[0].mxu0
    %v461 = vadd.f32 %v376, %v460
    %v462 = vpop.f32.mrb[0].mxu0
    %463 = vmatprep.mubr.f32.mxu0 0.0
    %464 = vmatmul.mubr.f32.gmra.mrb[0].mxu0 %v384
    %v465 = vpop.f32.mrb[0].mxu0
    %v466 = vadd.f32 %v376, %v465
    %v467 = vpop.f32.mrb[0].mxu0
    %468 = vmatprep.mubr.f32.mxu0 0.0
    %469 = vmatmul.mubr.f32.gmra.mrb[0].mxu0 %v387
    %v470 = vpop.f32.mrb[0].mxu0
    %v471 = vadd.f32 %v376, %v470
    %v472 = vpop.f32.mrb[0].mxu0
    %473 = vdwg.mxu0
    %v474 = vsel %vm154, %v456, 0.0
    %475 = vadd.xlane.f32.xlu0 %v474
    %v476 = vpop.xlane.xlu0 %475
    %v477 = vsel %vm154, %v461, 0.0
    %478 = vadd.xlane.f32.xlu0 %v477
    %v479 = vpop.xlane.xlu0 %478
    %v480 = vsel %vm154, %v466, 0.0
    %481 = vadd.xlane.f32.xlu0 %v480
    %v482 = vpop.xlane.xlu0 %481
    %v483 = vsel %vm154, %v471, 0.0
    %484 = vadd.xlane.f32.xlu0 %v483
    %v485 = vpop.xlane.xlu0 %484
    %v486 = vrcp.pop 32.0
    %v487 = vmul.f32 %v476, %v486
    %v488 = vmul.f32 %v479, %v486
    %v489 = vmul.f32 %v482, %v486
    %v490 = vmul.f32 %v485, %v486
    %v491 = vsub.f32 %v456, %v487
    %v492 = vsub.f32 %v461, %v488
    %v493 = vsub.f32 %v466, %v489
    %v494 = vsub.f32 %v471, %v490
    %v495 = vmul.f32 %v491, %v491
    %v496 = vmul.f32 %v492, %v492
    %v497 = vmul.f32 %v493, %v493
    %v498 = vmul.f32 %v494, %v494
    %v499 = vsel %vm154, %v495, 0.0
    %500 = vadd.xlane.f32.xlu0 %v499
    %v501 = vpop.xlane.xlu0 %500
    %v502 = vsel %vm154, %v496, 0.0
    %503 = vadd.xlane.f32.xlu0 %v502
    %v504 = vpop.xlane.xlu0 %503
    %v505 = vsel %vm154, %v497, 0.0
    %506 = vadd.xlane.f32.xlu0 %v505
    %v507 = vpop.xlane.xlu0 %506
    %v508 = vsel %vm154, %v498, 0.0
    %509 = vadd.xlane.f32.xlu0 %v508
    %v510 = vpop.xlane.xlu0 %509
    %v511 = vmul.f32 %v501, %v486
    %v512 = vmul.f32 %v504, %v486
    %v513 = vmul.f32 %v507, %v486
    %v514 = vmul.f32 %v510, %v486
    %v515 = vadd.f32 %v511, 1e-05
    %v516 = vadd.f32 %v512, 1e-05
    %v517 = vadd.f32 %v513, 1e-05
    %v518 = vadd.f32 %v514, 1e-05
    %v519 = vrsqrt.pop %v515
    %v520 = vrsqrt.pop %v516
    %v521 = vrsqrt.pop %v517
    %v522 = vrsqrt.pop %v518
    %v523 = vmul.f32 %v491, %v519
    %v524 = vmul.f32 %v492, %v520
    %v525 = vmul.f32 %v493, %v521
    %v526 = vmul.f32 %v494, %v522
    %v527 = vlaneseq
    %v528 = vshrl.u32 %v527, 7
    %v529 = vsub.s32 3, %v528
    %v530 = vrot.slane %v92, %v529
    %v531 = vmul.f32 %v523, %v530
    %v532 = vmul.f32 %v524, %v530
    %v533 = vmul.f32 %v525, %v530
    %v534 = vmul.f32 %v526, %v530
    %v535 = vlaneseq
    %v536 = vshrl.u32 %v535, 7
    %v537 = vsub.s32 4, %v536
    %v538 = vrot.slane %v92, %v537
    %v539 = vadd.f32 %v531, %v538
    %v540 = vadd.f32 %v532, %v538
    %v541 = vadd.f32 %v533, %v538
    %v542 = vadd.f32 %v534, %v538
    %v543 = vld [vmem:[%s2 + $0x8] sm:$0xff]
    %v544 = vld [vmem:[%s2 + $0x58] sm:$0xff]
    %v545 = vld [vmem:[%s2 + $0xa8] sm:$0xff]
    %v546 = vld [vmem:[%s2 + $0xf8] sm:$0xff]
    %v548 = vsel %vm154, %v539, 0
    %v551 = vsel %vm154, %v540, 0
    %v554 = vsel %vm154, %v541, 0
    %v557 = vsel %vm154, %v542, 0
    %559 = vmatprep.subr.mxu0 0.0
    %560 = vmatpush1.msra.mxu0 %v543
    %561 = vmatprep.subr.mxu0 0.0
    %562 = vmatpush1.msra.mxu0 %v544
    %563 = vmatprep.subr.mxu0 0.0
    %564 = vmatpush1.msra.mxu0 %v545
    %565 = vmatprep.subr.mxu0 0.0
    %566 = vmatpush1.msra.mxu0 %v546
    %567 = vmatprep.subr.mxu0 0.0
    %568 = vmatpush1.msra.mxu0 0.0
    %569 = vmatprep.subr.mxu0 0.0
    %570 = vmatpush1.msra.mxu0 0.0
    %571 = vmatprep.subr.mxu0 0.0
    %572 = vmatpush1.msra.mxu0 0.0
    %573 = vmatprep.subr.mxu0 0.0
    %574 = vmatpush1.msra.mxu0 0.0
    %575 = vmatprep.subr.mxu0 0.0
    %576 = vmatpush1.msra.mxu0 0.0
    %577 = vmatprep.subr.mxu0 0.0
    %578 = vmatpush1.msra.mxu0 0.0
    %579 = vmatprep.subr.mxu0 0.0
    %580 = vmatpush1.msra.mxu0 0.0
    %581 = vmatprep.subr.mxu0 0.0
    %582 = vmatpush1.msra.mxu0 0.0
    %583 = vmatprep.subr.mxu0 0.0
    %584 = vmatpush1.msra.mxu0 0.0
    %585 = vmatprep.subr.mxu0 0.0
    %586 = vmatpush1.msra.mxu0 0.0
    %587 = vmatprep.subr.mxu0 0.0
    %588 = vmatpush1.msra.mxu0 0.0
    %589 = vmatprep.subr.mxu0 0.0
    %590 = vmatpush1.msra.mxu0 0.0
    %591 = vmatprep.subr.mxu0 0.0
    %592 = vmatpush1.msra.mxu0 0.0
    %593 = vmatprep.subr.mxu0 0.0
    %594 = vmatpush1.msra.mxu0 0.0
    %595 = vmatprep.subr.mxu0 0.0
    %596 = vmatpush1.msra.mxu0 0.0
    %597 = vmatprep.subr.mxu0 0.0
    %598 = vmatpush1.msra.mxu0 0.0
    %599 = vmatprep.subr.mxu0 0.0
    %600 = vmatpush1.msra.mxu0 0.0
    %601 = vmatprep.subr.mxu0 0.0
    %602 = vmatpush1.msra.mxu0 0.0
    %603 = vmatprep.subr.mxu0 0.0
    %604 = vmatpush1.msra.mxu0 0.0
    %605 = vmatprep.subr.mxu0 0.0
    %606 = vmatpush1.msra.mxu0 0.0
    %607 = vmatprep.subr.mxu0 0.0
    %608 = vmatpush1.msra.mxu0 0.0
    %609 = vmatprep.subr.mxu0 0.0
    %610 = vmatpush1.msra.mxu0 0.0
    %611 = vmatprep.subr.mxu0 0.0
    %612 = vmatpush1.msra.mxu0 0.0
    %613 = vmatprep.subr.mxu0 0.0
    %614 = vmatpush1.msra.mxu0 0.0
    %615 = vmatprep.subr.mxu0 0.0
    %616 = vmatpush1.msra.mxu0 0.0
    %617 = vmatprep.subr.mxu0 0.0
    %618 = vmatpush1.msra.mxu0 0.0
    %619 = vmatprep.subr.mxu0 0.0
    %620 = vmatpush1.msra.mxu0 0.0
    %621 = vmatprep.subr.mxu0 0.0
    %622 = vmatpush1.msra.mxu0 0.0
    %623 = vmatprep.mubr.f32.mxu0 0.0
    %624 = vmatmul.mubr.f32.gmra.mrb[0].mxu0 %v548
    %v625 = vpop.f32.mrb[0].mxu0
    %v626 = vadd.f32 0.0, %v625
    %v627 = vpop.f32.mrb[0].mxu0
    %628 = vmatprep.mubr.f32.mxu0 0.0
    %629 = vmatmul.mubr.f32.gmra.mrb[0].mxu0 %v551
    %v630 = vpop.f32.mrb[0].mxu0
    %v631 = vadd.f32 0.0, %v630
    %v632 = vpop.f32.mrb[0].mxu0
    %633 = vmatprep.mubr.f32.mxu0 0.0
    %634 = vmatmul.mubr.f32.gmra.mrb[0].mxu0 %v554
    %v635 = vpop.f32.mrb[0].mxu0
    %v636 = vadd.f32 0.0, %v635
    %v637 = vpop.f32.mrb[0].mxu0
    %638 = vmatprep.mubr.f32.mxu0 0.0
    %639 = vmatmul.mubr.f32.gmra.mrb[0].mxu0 %v557
    %v640 = vpop.f32.mrb[0].mxu0
    %v641 = vadd.f32 0.0, %v640
    %v642 = vpop.f32.mrb[0].mxu0
    %643 = vdwg.mxu0
    %v644 = vld [vmem:[%s2 + $0x10] sm:$0xff]
    %v645 = vld [vmem:[%s2 + $0x60] sm:$0xff]
    %v646 = vld [vmem:[%s2 + $0xb0] sm:$0xff]
    %v647 = vld [vmem:[%s2 + $0x100] sm:$0xff]
    %648 = vmatprep.subr.mxu0 0.0
    %649 = vmatpush1.msra.mxu0 %v644
    %650 = vmatprep.subr.mxu0 0.0
    %651 = vmatpush1.msra.mxu0 %v645
    %652 = vmatprep.subr.mxu0 0.0
    %653 = vmatpush1.msra.mxu0 %v646
    %654 = vmatprep.subr.mxu0 0.0
    %655 = vmatpush1.msra.mxu0 %v647
    %656 = vmatprep.subr.mxu0 0.0
    %657 = vmatpush1.msra.mxu0 0.0
    %658 = vmatprep.subr.mxu0 0.0
    %659 = vmatpush1.msra.mxu0 0.0
    %660 = vmatprep.subr.mxu0 0.0
    %661 = vmatpush1.msra.mxu0 0.0
    %662 = vmatprep.subr.mxu0 0.0
    %663 = vmatpush1.msra.mxu0 0.0
    %664 = vmatprep.subr.mxu0 0.0
    %665 = vmatpush1.msra.mxu0 0.0
    %666 = vmatprep.subr.mxu0 0.0
    %667 = vmatpush1.msra.mxu0 0.0
    %668 = vmatprep.subr.mxu0 0.0
    %669 = vmatpush1.msra.mxu0 0.0
    %670 = vmatprep.subr.mxu0 0.0
    %671 = vmatpush1.msra.mxu0 0.0
    %672 = vmatprep.subr.mxu0 0.0
    %673 = vmatpush1.msra.mxu0 0.0
    %674 = vmatprep.subr.mxu0 0.0
    %675 = vmatpush1.msra.mxu0 0.0
    %676 = vmatprep.subr.mxu0 0.0
    %677 = vmatpush1.msra.mxu0 0.0
    %678 = vmatprep.subr.mxu0 0.0
    %679 = vmatpush1.msra.mxu0 0.0
    %680 = vmatprep.subr.mxu0 0.0
    %681 = vmatpush1.msra.mxu0 0.0
    %682 = vmatprep.subr.mxu0 0.0
    %683 = vmatpush1.msra.mxu0 0.0
    %684 = vmatprep.subr.mxu0 0.0
    %685 = vmatpush1.msra.mxu0 0.0
    %686 = vmatprep.subr.mxu0 0.0
    %687 = vmatpush1.msra.mxu0 0.0
    %688 = vmatprep.subr.mxu0 0.0
    %689 = vmatpush1.msra.mxu0 0.0
    %690 = vmatprep.subr.mxu0 0.0
    %691 = vmatpush1.msra.mxu0 0.0
    %692 = vmatprep.subr.mxu0 0.0
    %693 = vmatpush1.msra.mxu0 0.0
    %694 = vmatprep.subr.mxu0 0.0
    %695 = vmatpush1.msra.mxu0 0.0
    %696 = vmatprep.subr.mxu0 0.0
    %697 = vmatpush1.msra.mxu0 0.0
    %698 = vmatprep.subr.mxu0 0.0
    %699 = vmatpush1.msra.mxu0 0.0
    %700 = vmatprep.subr.mxu0 0.0
    %701 = vmatpush1.msra.mxu0 0.0
    %702 = vmatprep.subr.mxu0 0.0
    %703 = vmatpush1.msra.mxu0 0.0
    %704 = vmatprep.subr.mxu0 0.0
    %705 = vmatpush1.msra.mxu0 0.0
    %706 = vmatprep.subr.mxu0 0.0
    %707 = vmatpush1.msra.mxu0 0.0
    %708 = vmatprep.subr.mxu0 0.0
    %709 = vmatpush1.msra.mxu0 0.0
    %710 = vmatprep.subr.mxu0 0.0
    %711 = vmatpush1.msra.mxu0 0.0
    %712 = vmatprep.mubr.f32.mxu0 0.0
    %713 = vmatmul.mubr.f32.gmra.mrb[0].mxu0 %v548
    %v714 = vpop.f32.mrb[0].mxu0
    %v715 = vadd.f32 0.0, %v714
    %v716 = vpop.f32.mrb[0].mxu0
    %717 = vmatprep.mubr.f32.mxu0 0.0
    %718 = vmatmul.mubr.f32.gmra.mrb[0].mxu0 %v551
    %v719 = vpop.f32.mrb[0].mxu0
    %v720 = vadd.f32 0.0, %v719
    %v721 = vpop.f32.mrb[0].mxu0
    %722 = vmatprep.mubr.f32.mxu0 0.0
    %723 = vmatmul.mubr.f32.gmra.mrb[0].mxu0 %v554
    %v724 = vpop.f32.mrb[0].mxu0
    %v725 = vadd.f32 0.0, %v724
    %v726 = vpop.f32.mrb[0].mxu0
    %727 = vmatprep.mubr.f32.mxu0 0.0
    %728 = vmatmul.mubr.f32.gmra.mrb[0].mxu0 %v557
    %v729 = vpop.f32.mrb[0].mxu0
    %v730 = vadd.f32 0.0, %v729
    %v731 = vpop.f32.mrb[0].mxu0
    %732 = vdwg.mxu0
    %v733 = vld [vmem:[%s2 + $0x18] sm:$0xff]
    %v734 = vld [vmem:[%s2 + $0x68] sm:$0xff]
    %v735 = vld [vmem:[%s2 + $0xb8] sm:$0xff]
    %v736 = vld [vmem:[%s2 + $0x108] sm:$0xff]
    %v738 = vsel %vm154, %v122, 0
    %v741 = vsel %vm154, %v123, 0
    %v744 = vsel %vm154, %v124, 0
    %v747 = vsel %vm154, %v125, 0
    %v750 = vsel %vm154, %v126, 0
    %v753 = vsel %vm154, %v127, 0
    %v756 = vsel %vm154, %v128, 0
    %v759 = vsel %vm154, %v129, 0
    %v762 = vsel %vm154, %v130, 0
    %v765 = vsel %vm154, %v131, 0
    %v768 = vsel %vm154, %v132, 0
    %v771 = vsel %vm154, %v133, 0
    %v774 = vsel %vm154, %v134, 0
    %v777 = vsel %vm154, %v135, 0
    %v780 = vsel %vm154, %v136, 0
    %v783 = vsel %vm154, %v137, 0
    %785 = vmatprep.subr.mxu0 0.0
    %786 = vmatpush1.msra.mxu0 %v715
    %787 = vmatprep.subr.mxu0 0.0
    %788 = vmatpush1.msra.mxu0 %v720
    %789 = vmatprep.subr.mxu0 0.0
    %790 = vmatpush1.msra.mxu0 %v725
    %791 = vmatprep.subr.mxu0 0.0
    %792 = vmatpush1.msra.mxu0 %v730
    %793 = vmatprep.subr.mxu0 0.0
    %794 = vmatpush1.msra.mxu0 0.0
    %795 = vmatprep.subr.mxu0 0.0
    %796 = vmatpush1.msra.mxu0 0.0
    %797 = vmatprep.subr.mxu0 0.0
    %798 = vmatpush1.msra.mxu0 0.0
    %799 = vmatprep.subr.mxu0 0.0
    %800 = vmatpush1.msra.mxu0 0.0
    %801 = vmatprep.subr.mxu0 0.0
    %802 = vmatpush1.msra.mxu0 0.0
    %803 = vmatprep.subr.mxu0 0.0
    %804 = vmatpush1.msra.mxu0 0.0
    %805 = vmatprep.subr.mxu0 0.0
    %806 = vmatpush1.msra.mxu0 0.0
    %807 = vmatprep.subr.mxu0 0.0
    %808 = vmatpush1.msra.mxu0 0.0
    %809 = vmatprep.subr.mxu0 0.0
    %810 = vmatpush1.msra.mxu0 0.0
    %811 = vmatprep.subr.mxu0 0.0
    %812 = vmatpush1.msra.mxu0 0.0
    %813 = vmatprep.subr.mxu0 0.0
    %814 = vmatpush1.msra.mxu0 0.0
    %815 = vmatprep.subr.mxu0 0.0
    %816 = vmatpush1.msra.mxu0 0.0
    %817 = vmatprep.subr.mxu0 0.0
    %818 = vmatpush1.msra.mxu0 0.0
    %819 = vmatprep.subr.mxu0 0.0
    %820 = vmatpush1.msra.mxu0 0.0
    %821 = vmatprep.subr.mxu0 0.0
    %822 = vmatpush1.msra.mxu0 0.0
    %823 = vmatprep.subr.mxu0 0.0
    %824 = vmatpush1.msra.mxu0 0.0
    %825 = vmatprep.subr.mxu0 0.0
    %826 = vmatpush1.msra.mxu0 0.0
    %827 = vmatprep.subr.mxu0 0.0
    %828 = vmatpush1.msra.mxu0 0.0
    %829 = vmatprep.subr.mxu0 0.0
    %830 = vmatpush1.msra.mxu0 0.0
    %831 = vmatprep.subr.mxu0 0.0
    %832 = vmatpush1.msra.mxu0 0.0
    %833 = vmatprep.subr.mxu0 0.0
    %834 = vmatpush1.msra.mxu0 0.0
    %835 = vmatprep.subr.mxu0 0.0
    %836 = vmatpush1.msra.mxu0 0.0
    %837 = vmatprep.subr.mxu0 0.0
    %838 = vmatpush1.msra.mxu0 0.0
    %839 = vmatprep.subr.mxu0 0.0
    %840 = vmatpush1.msra.mxu0 0.0
    %841 = vmatprep.subr.mxu0 0.0
    %842 = vmatpush1.msra.mxu0 0.0
    %843 = vmatprep.subr.mxu0 0.0
    %844 = vmatpush1.msra.mxu0 0.0
    %845 = vmatprep.subr.mxu0 0.0
    %846 = vmatpush1.msra.mxu0 0.0
    %847 = vmatprep.subr.mxu0 0.0
    %848 = vmatpush1.msra.mxu0 0.0
    %849 = vmatprep.mubr.f32.mxu0 0.0
    %850 = vmatmul.mubr.f32.gmra.mrb[0].mxu0 %v738
    %v851 = vpop.f32.mrb[0].mxu0
    %v852 = vadd.f32 0.0, %v851
    %v853 = vpop.f32.mrb[0].mxu0
    %854 = vmatprep.mubr.f32.mxu0 0.0
    %855 = vmatmul.mubr.f32.gmra.mrb[0].mxu0 %v741
    %v856 = vpop.f32.mrb[0].mxu0
    %v857 = vadd.f32 0.0, %v856
    %v858 = vpop.f32.mrb[0].mxu0
    %859 = vmatprep.mubr.f32.mxu0 0.0
    %860 = vmatmul.mubr.f32.gmra.mrb[0].mxu0 %v744
    %v861 = vpop.f32.mrb[0].mxu0
    %v862 = vadd.f32 0.0, %v861
    %v863 = vpop.f32.mrb[0].mxu0
    %864 = vmatprep.mubr.f32.mxu0 0.0
    %865 = vmatmul.mubr.f32.gmra.mrb[0].mxu0 %v747
    %v866 = vpop.f32.mrb[0].mxu0
    %v867 = vadd.f32 0.0, %v866
    %v868 = vpop.f32.mrb[0].mxu0
    %869 = vmatprep.mubr.f32.mxu0 0.0
    %870 = vmatmul.mubr.f32.gmra.mrb[0].mxu0 %v750
    %v871 = vpop.f32.mrb[0].mxu0
    %v872 = vadd.f32 0.0, %v871
    %v873 = vpop.f32.mrb[0].mxu0
    %874 = vmatprep.mubr.f32.mxu0 0.0
    %875 = vmatmul.mubr.f32.gmra.mrb[0].mxu0 %v753
    %v876 = vpop.f32.mrb[0].mxu0
    %v877 = vadd.f32 0.0, %v876
    %v878 = vpop.f32.mrb[0].mxu0
    %879 = vmatprep.mubr.f32.mxu0 0.0
    %880 = vmatmul.mubr.f32.gmra.mrb[0].mxu0 %v756
    %v881 = vpop.f32.mrb[0].mxu0
    %v882 = vadd.f32 0.0, %v881
    %v883 = vpop.f32.mrb[0].mxu0
    %884 = vmatprep.mubr.f32.mxu0 0.0
    %885 = vmatmul.mubr.f32.gmra.mrb[0].mxu0 %v759
    %v886 = vpop.f32.mrb[0].mxu0
    %v887 = vadd.f32 0.0, %v886
    %v888 = vpop.f32.mrb[0].mxu0
    %889 = vmatprep.mubr.f32.mxu0 0.0
    %890 = vmatmul.mubr.f32.gmra.mrb[0].mxu0 %v762
    %v891 = vpop.f32.mrb[0].mxu0
    %v892 = vadd.f32 0.0, %v891
    %v893 = vpop.f32.mrb[0].mxu0
    %894 = vmatprep.mubr.f32.mxu0 0.0
    %895 = vmatmul.mubr.f32.gmra.mrb[0].mxu0 %v765
    %v896 = vpop.f32.mrb[0].mxu0
    %v897 = vadd.f32 0.0, %v896
    %v898 = vpop.f32.mrb[0].mxu0
    %899 = vmatprep.mubr.f32.mxu0 0.0
    %900 = vmatmul.mubr.f32.gmra.mrb[0].mxu0 %v768
    %v901 = vpop.f32.mrb[0].mxu0
    %v902 = vadd.f32 0.0, %v901
    %v903 = vpop.f32.mrb[0].mxu0
    %904 = vmatprep.mubr.f32.mxu0 0.0
    %905 = vmatmul.mubr.f32.gmra.mrb[0].mxu0 %v771
    %v906 = vpop.f32.mrb[0].mxu0
    %v907 = vadd.f32 0.0, %v906
    %v908 = vpop.f32.mrb[0].mxu0
    %909 = vmatprep.mubr.f32.mxu0 0.0
    %910 = vmatmul.mubr.f32.gmra.mrb[0].mxu0 %v774
    %v911 = vpop.f32.mrb[0].mxu0
    %v912 = vadd.f32 0.0, %v911
    %v913 = vpop.f32.mrb[0].mxu0
    %914 = vmatprep.mubr.f32.mxu0 0.0
    %915 = vmatmul.mubr.f32.gmra.mrb[0].mxu0 %v777
    %v916 = vpop.f32.mrb[0].mxu0
    %v917 = vadd.f32 0.0, %v916
    %v918 = vpop.f32.mrb[0].mxu0
    %919 = vmatprep.mubr.f32.mxu0 0.0
    %920 = vmatmul.mubr.f32.gmra.mrb[0].mxu0 %v780
    %v921 = vpop.f32.mrb[0].mxu0
    %v922 = vadd.f32 0.0, %v921
    %v923 = vpop.f32.mrb[0].mxu0
    %924 = vmatprep.mubr.f32.mxu0 0.0
    %925 = vmatmul.mubr.f32.gmra.mrb[0].mxu0 %v783
    %v926 = vpop.f32.mrb[0].mxu0
    %v927 = vadd.f32 0.0, %v926
    %v928 = vpop.f32.mrb[0].mxu0
    %929 = vdwg.mxu0
    %v930 = vmul.f32 %v852, %v106
    %v931 = vmul.f32 %v857, %v107
    %v932 = vmul.f32 %v862, %v108
    %v933 = vmul.f32 %v867, %v109
    %v934 = vmul.f32 %v872, %v110
    %v935 = vmul.f32 %v877, %v111
    %v936 = vmul.f32 %v882, %v112
    %v937 = vmul.f32 %v887, %v113
    %v938 = vmul.f32 %v892, %v114
    %v939 = vmul.f32 %v897, %v115
    %v940 = vmul.f32 %v902, %v116
    %v941 = vmul.f32 %v907, %v117
    %v942 = vmul.f32 %v912, %v118
    %v943 = vmul.f32 %v917, %v119
    %v944 = vmul.f32 %v922, %v120
    %v945 = vmul.f32 %v927, %v121
    %vm946 = vcmask 523264
    %v948 = vsel %vm946, %v626, 0
    %v951 = vsel %vm946, %v631, 0
    %v954 = vsel %vm946, %v636, 0
    %v957 = vsel %vm946, %v641, 0
    %v960 = vsel %vm946, %v930, 0
    %v963 = vsel %vm946, %v931, 0
    %v966 = vsel %vm946, %v932, 0
    %v969 = vsel %vm946, %v933, 0
    %v972 = vsel %vm946, %v934, 0
    %v975 = vsel %vm946, %v935, 0
    %v978 = vsel %vm946, %v936, 0
    %v981 = vsel %vm946, %v937, 0
    %v984 = vsel %vm946, %v938, 0
    %v987 = vsel %vm946, %v939, 0
    %v990 = vsel %vm946, %v940, 0
    %v993 = vsel %vm946, %v941, 0
    %v996 = vsel %vm946, %v942, 0
    %v999 = vsel %vm946, %v943, 0
    %v1002 = vsel %vm946, %v944, 0
    %v1005 = vsel %vm946, %v945, 0
    %1007 = vmatprep.subr.mxu0 0.0
    %1008 = vmatpush1.xpose.msra.mxu0 %v960
    %1009 = vmatprep.subr.mxu0 0.0
    %1010 = vmatpush1.xpose.msra.mxu0 %v963
    %1011 = vmatprep.subr.mxu0 0.0
    %1012 = vmatpush1.xpose.msra.mxu0 %v966
    %1013 = vmatprep.subr.mxu0 0.0
    %1014 = vmatpush1.xpose.msra.mxu0 %v969
    %1015 = vmatprep.subr.mxu0 0.0
    %1016 = vmatpush1.xpose.msra.mxu0 %v972
    %1017 = vmatprep.subr.mxu0 0.0
    %1018 = vmatpush1.xpose.msra.mxu0 %v975
    %1019 = vmatprep.subr.mxu0 0.0
    %1020 = vmatpush1.xpose.msra.mxu0 %v978
    %1021 = vmatprep.subr.mxu0 0.0
    %1022 = vmatpush1.xpose.msra.mxu0 %v981
    %1023 = vmatprep.subr.mxu0 0.0
    %1024 = vmatpush1.xpose.msra.mxu0 %v984
    %1025 = vmatprep.subr.mxu0 0.0
    %1026 = vmatpush1.xpose.msra.mxu0 %v987
    %1027 = vmatprep.subr.mxu0 0.0
    %1028 = vmatpush1.xpose.msra.mxu0 %v990
    %1029 = vmatprep.subr.mxu0 0.0
    %1030 = vmatpush1.xpose.msra.mxu0 %v993
    %1031 = vmatprep.subr.mxu0 0.0
    %1032 = vmatpush1.xpose.msra.mxu0 %v996
    %1033 = vmatprep.subr.mxu0 0.0
    %1034 = vmatpush1.xpose.msra.mxu0 %v999
    %1035 = vmatprep.subr.mxu0 0.0
    %1036 = vmatpush1.xpose.msra.mxu0 %v1002
    %1037 = vmatprep.subr.mxu0 0.0
    %1038 = vmatpush1.xpose.msra.mxu0 %v1005
    %1039 = vmatprep.subr.mxu0 0.0
    %1040 = vmatpush1.xpose.msra.mxu0 0.0
    %1041 = vmatprep.subr.mxu0 0.0
    %1042 = vmatpush1.xpose.msra.mxu0 0.0
    %1043 = vmatprep.subr.mxu0 0.0
    %1044 = vmatpush1.xpose.msra.mxu0 0.0
    %1045 = vmatprep.subr.mxu0 0.0
    %1046 = vmatpush1.xpose.msra.mxu0 0.0
    %1047 = vmatprep.subr.mxu0 0.0
    %1048 = vmatpush1.xpose.msra.mxu0 0.0
    %1049 = vmatprep.subr.mxu0 0.0
    %1050 = vmatpush1.xpose.msra.mxu0 0.0
    %1051 = vmatprep.subr.mxu0 0.0
    %1052 = vmatpush1.xpose.msra.mxu0 0.0
    %1053 = vmatprep.subr.mxu0 0.0
    %1054 = vmatpush1.xpose.msra.mxu0 0.0
    %1055 = vmatprep.subr.mxu0 0.0
    %1056 = vmatpush1.xpose.msra.mxu0 0.0
    %1057 = vmatprep.subr.mxu0 0.0
    %1058 = vmatpush1.xpose.msra.mxu0 0.0
    %1059 = vmatprep.subr.mxu0 0.0
    %1060 = vmatpush1.xpose.msra.mxu0 0.0
    %1061 = vmatprep.subr.mxu0 0.0
    %1062 = vmatpush1.xpose.msra.mxu0 0.0
    %1063 = vmatprep.subr.mxu0 0.0
    %1064 = vmatpush1.xpose.msra.mxu0 0.0
    %1065 = vmatprep.subr.mxu0 0.0
    %1066 = vmatpush1.xpose.msra.mxu0 0.0
    %1067 = vmatprep.subr.mxu0 0.0
    %1068 = vmatpush1.xpose.msra.mxu0 0.0
    %1069 = vmatprep.subr.mxu0 0.0
    %1070 = vmatpush1.xpose.msra.mxu0 0.0
    %1071 = vmatprep.mubr.f32.mxu0 0.0
    %1072 = vmatmul.mubr.f32.gmra.mrb[0].mxu0 %v948
    %v1073 = vpop.f32.mrb[0].mxu0
    %v1074 = vadd.f32 %v98, %v1073
    %v1075 = vpop.f32.mrb[0].mxu0
    %1076 = vmatprep.mubr.f32.mxu0 0.0
    %1077 = vmatmul.mubr.f32.gmra.mrb[0].mxu0 %v951
    %v1078 = vpop.f32.mrb[0].mxu0
    %v1079 = vadd.f32 %v99, %v1078
    %v1080 = vpop.f32.mrb[0].mxu0
    %1081 = vmatprep.mubr.f32.mxu0 0.0
    %1082 = vmatmul.mubr.f32.gmra.mrb[0].mxu0 %v954
    %v1083 = vpop.f32.mrb[0].mxu0
    %v1084 = vadd.f32 %v100, %v1083
    %v1085 = vpop.f32.mrb[0].mxu0
    %1086 = vmatprep.mubr.f32.mxu0 0.0
    %1087 = vmatmul.mubr.f32.gmra.mrb[0].mxu0 %v957
    %v1088 = vpop.f32.mrb[0].mxu0
    %v1089 = vadd.f32 %v101, %v1088
    %v1090 = vpop.f32.mrb[0].mxu0
    %1091 = vdwg.mxu0
    %1092 = vmax.xlane.f32.xlu0 %v1074
    %v1093 = vpop.xlane.xlu0 %1092
    %1094 = vmax.xlane.f32.xlu0 %v1079
    %v1095 = vpop.xlane.xlu0 %1094
    %1096 = vmax.xlane.f32.xlu0 %v1084
    %v1097 = vpop.xlane.xlu0 %1096
    %1098 = vmax.xlane.f32.xlu0 %v1089
    %v1099 = vpop.xlane.xlu0 %1098
    %v1100 = vsub.f32 %v1074, %v1093
    %v1101 = vsub.f32 %v1079, %v1095
    %v1102 = vsub.f32 %v1084, %v1097
    %v1103 = vsub.f32 %v1089, %v1099
    %v1104 = vmul.f32 %v1100, 1.442695
    %v1105 = vpow.pop %v1104
    %v1106 = vmul.f32 %v1101, 1.442695
    %v1107 = vpow.pop %v1106
    %v1108 = vmul.f32 %v1102, 1.442695
    %v1109 = vpow.pop %v1108
    %v1110 = vmul.f32 %v1103, 1.442695
    %v1111 = vpow.pop %v1110
    %1112 = vmatprep.subr.mxu0 0.0
    %1113 = vmatpush1.msra.mxu0 %v930
    %1114 = vmatprep.subr.mxu0 0.0
    %1115 = vmatpush1.msra.mxu0 %v931
    %1116 = vmatprep.subr.mxu0 0.0
    %1117 = vmatpush1.msra.mxu0 %v932
    %1118 = vmatprep.subr.mxu0 0.0
    %1119 = vmatpush1.msra.mxu0 %v933
    %1120 = vmatprep.subr.mxu0 0.0
    %1121 = vmatpush1.msra.mxu0 %v934
    %1122 = vmatprep.subr.mxu0 0.0
    %1123 = vmatpush1.msra.mxu0 %v935
    %1124 = vmatprep.subr.mxu0 0.0
    %1125 = vmatpush1.msra.mxu0 %v936
    %1126 = vmatprep.subr.mxu0 0.0
    %1127 = vmatpush1.msra.mxu0 %v937
    %1128 = vmatprep.subr.mxu0 0.0
    %1129 = vmatpush1.msra.mxu0 %v938
    %1130 = vmatprep.subr.mxu0 0.0
    %1131 = vmatpush1.msra.mxu0 %v939
    %1132 = vmatprep.subr.mxu0 0.0
    %1133 = vmatpush1.msra.mxu0 %v940
    %1134 = vmatprep.subr.mxu0 0.0
    %1135 = vmatpush1.msra.mxu0 %v941
    %1136 = vmatprep.subr.mxu0 0.0
    %1137 = vmatpush1.msra.mxu0 %v942
    %1138 = vmatprep.subr.mxu0 0.0
    %1139 = vmatpush1.msra.mxu0 %v943
    %1140 = vmatprep.subr.mxu0 0.0
    %1141 = vmatpush1.msra.mxu0 %v944
    %1142 = vmatprep.subr.mxu0 0.0
    %1143 = vmatpush1.msra.mxu0 %v945
    %1144 = vmatprep.subr.mxu0 0.0
    %1145 = vmatpush1.msra.mxu0 0.0
    %1146 = vmatprep.subr.mxu0 0.0
    %1147 = vmatpush1.msra.mxu0 0.0
    %1148 = vmatprep.subr.mxu0 0.0
    %1149 = vmatpush1.msra.mxu0 0.0
    %1150 = vmatprep.subr.mxu0 0.0
    %1151 = vmatpush1.msra.mxu0 0.0
    %1152 = vmatprep.subr.mxu0 0.0
    %1153 = vmatpush1.msra.mxu0 0.0
    %1154 = vmatprep.subr.mxu0 0.0
    %1155 = vmatpush1.msra.mxu0 0.0
    %1156 = vmatprep.subr.mxu0 0.0
    %1157 = vmatpush1.msra.mxu0 0.0
    %1158 = vmatprep.subr.mxu0 0.0
    %1159 = vmatpush1.msra.mxu0 0.0
    %1160 = vmatprep.subr.mxu0 0.0
    %1161 = vmatpush1.msra.mxu0 0.0
    %1162 = vmatprep.subr.mxu0 0.0
    %1163 = vmatpush1.msra.mxu0 0.0
    %1164 = vmatprep.subr.mxu0 0.0
    %1165 = vmatpush1.msra.mxu0 0.0
    %1166 = vmatprep.subr.mxu0 0.0
    %1167 = vmatpush1.msra.mxu0 0.0
    %1168 = vmatprep.subr.mxu0 0.0
    %1169 = vmatpush1.msra.mxu0 0.0
    %1170 = vmatprep.subr.mxu0 0.0
    %1171 = vmatpush1.msra.mxu0 0.0
    %1172 = vmatprep.subr.mxu0 0.0
    %1173 = vmatpush1.msra.mxu0 0.0
    %1174 = vmatprep.subr.mxu0 0.0
    %1175 = vmatpush1.msra.mxu0 0.0
    %1176 = vmatprep.mubr.f32.mxu0 0.0
    %1177 = vmatmul.mubr.f32.gmra.mrb[0].mxu0 %v1105
    %v1178 = vpop.f32.mrb[0].mxu0
    %v1179 = vadd.f32 0.0, %v1178
    %v1180 = vpop.f32.mrb[0].mxu0
    %1181 = vmatprep.mubr.f32.mxu0 0.0
    %1182 = vmatmul.mubr.f32.gmra.mrb[0].mxu0 %v1107
    %v1183 = vpop.f32.mrb[0].mxu0
    %v1184 = vadd.f32 0.0, %v1183
    %v1185 = vpop.f32.mrb[0].mxu0
    %1186 = vmatprep.mubr.f32.mxu0 0.0
    %1187 = vmatmul.mubr.f32.gmra.mrb[0].mxu0 %v1109
    %v1188 = vpop.f32.mrb[0].mxu0
    %v1189 = vadd.f32 0.0, %v1188
    %v1190 = vpop.f32.mrb[0].mxu0
    %1191 = vmatprep.mubr.f32.mxu0 0.0
    %1192 = vmatmul.mubr.f32.gmra.mrb[0].mxu0 %v1111
    %v1193 = vpop.f32.mrb[0].mxu0
    %v1194 = vadd.f32 0.0, %v1193
    %v1195 = vpop.f32.mrb[0].mxu0
    %1196 = vdwg.mxu0
    %1197 = vmatprep.subr.mxu0 0.0
    %1198 = vmatpush1.msra.mxu0 %v106
    %1199 = vmatprep.subr.mxu0 0.0
    %1200 = vmatpush1.msra.mxu0 %v107
    %1201 = vmatprep.subr.mxu0 0.0
    %1202 = vmatpush1.msra.mxu0 %v108
    %1203 = vmatprep.subr.mxu0 0.0
    %1204 = vmatpush1.msra.mxu0 %v109
    %1205 = vmatprep.subr.mxu0 0.0
    %1206 = vmatpush1.msra.mxu0 %v110
    %1207 = vmatprep.subr.mxu0 0.0
    %1208 = vmatpush1.msra.mxu0 %v111
    %1209 = vmatprep.subr.mxu0 0.0
    %1210 = vmatpush1.msra.mxu0 %v112
    %1211 = vmatprep.subr.mxu0 0.0
    %1212 = vmatpush1.msra.mxu0 %v113
    %1213 = vmatprep.subr.mxu0 0.0
    %1214 = vmatpush1.msra.mxu0 %v114
    %1215 = vmatprep.subr.mxu0 0.0
    %1216 = vmatpush1.msra.mxu0 %v115
    %1217 = vmatprep.subr.mxu0 0.0
    %1218 = vmatpush1.msra.mxu0 %v116
    %1219 = vmatprep.subr.mxu0 0.0
    %1220 = vmatpush1.msra.mxu0 %v117
    %1221 = vmatprep.subr.mxu0 0.0
    %1222 = vmatpush1.msra.mxu0 %v118
    %1223 = vmatprep.subr.mxu0 0.0
    %1224 = vmatpush1.msra.mxu0 %v119
    %1225 = vmatprep.subr.mxu0 0.0
    %1226 = vmatpush1.msra.mxu0 %v120
    %1227 = vmatprep.subr.mxu0 0.0
    %1228 = vmatpush1.msra.mxu0 %v121
    %1229 = vmatprep.subr.mxu0 0.0
    %1230 = vmatpush1.msra.mxu0 0.0
    %1231 = vmatprep.subr.mxu0 0.0
    %1232 = vmatpush1.msra.mxu0 0.0
    %1233 = vmatprep.subr.mxu0 0.0
    %1234 = vmatpush1.msra.mxu0 0.0
    %1235 = vmatprep.subr.mxu0 0.0
    %1236 = vmatpush1.msra.mxu0 0.0
    %1237 = vmatprep.subr.mxu0 0.0
    %1238 = vmatpush1.msra.mxu0 0.0
    %1239 = vmatprep.subr.mxu0 0.0
    %1240 = vmatpush1.msra.mxu0 0.0
    %1241 = vmatprep.subr.mxu0 0.0
    %1242 = vmatpush1.msra.mxu0 0.0
    %1243 = vmatprep.subr.mxu0 0.0
    %1244 = vmatpush1.msra.mxu0 0.0
    %1245 = vmatprep.subr.mxu0 0.0
    %1246 = vmatpush1.msra.mxu0 0.0
    %1247 = vmatprep.subr.mxu0 0.0
    %1248 = vmatpush1.msra.mxu0 0.0
    %1249 = vmatprep.subr.mxu0 0.0
    %1250 = vmatpush1.msra.mxu0 0.0
    %1251 = vmatprep.subr.mxu0 0.0
    %1252 = vmatpush1.msra.mxu0 0.0
    %1253 = vmatprep.subr.mxu0 0.0
    %1254 = vmatpush1.msra.mxu0 0.0
    %1255 = vmatprep.subr.mxu0 0.0
    %1256 = vmatpush1.msra.mxu0 0.0
    %1257 = vmatprep.subr.mxu0 0.0
    %1258 = vmatpush1.msra.mxu0 0.0
    %1259 = vmatprep.subr.mxu0 0.0
    %1260 = vmatpush1.msra.mxu0 0.0
    %1261 = vmatprep.mubr.f32.mxu0 0.0
    %1262 = vmatmul.mubr.f32.gmra.mrb[0].mxu0 %v1105
    %v1263 = vpop.f32.mrb[0].mxu0
    %v1264 = vadd.f32 0.0, %v1263
    %v1265 = vpop.f32.mrb[0].mxu0
    %1266 = vmatprep.mubr.f32.mxu0 0.0
    %1267 = vmatmul.mubr.f32.gmra.mrb[0].mxu0 %v1107
    %v1268 = vpop.f32.mrb[0].mxu0
    %v1269 = vadd.f32 0.0, %v1268
    %v1270 = vpop.f32.mrb[0].mxu0
    %1271 = vmatprep.mubr.f32.mxu0 0.0
    %1272 = vmatmul.mubr.f32.gmra.mrb[0].mxu0 %v1109
    %v1273 = vpop.f32.mrb[0].mxu0
    %v1274 = vadd.f32 0.0, %v1273
    %v1275 = vpop.f32.mrb[0].mxu0
    %1276 = vmatprep.mubr.f32.mxu0 0.0
    %1277 = vmatmul.mubr.f32.gmra.mrb[0].mxu0 %v1111
    %v1278 = vpop.f32.mrb[0].mxu0
    %v1279 = vadd.f32 0.0, %v1278
    %v1280 = vpop.f32.mrb[0].mxu0
    %1281 = vdwg.mxu0
    %v1282 = vmax.f32 %v1264, 1e-30
    %v1283 = vmax.f32 %v1269, 1e-30
    %v1284 = vmax.f32 %v1274, 1e-30
    %v1285 = vmax.f32 %v1279, 1e-30
    %v1286 = vrcp.pop %v1282
    %v1287 = vrcp.pop %v1283
    %v1288 = vrcp.pop %v1284
    %v1289 = vrcp.pop %v1285
    %v1290 = vmul.f32 %v1179, %v1286
    %v1291 = vmul.f32 %v1184, %v1287
    %v1292 = vmul.f32 %v1189, %v1288
    %v1293 = vmul.f32 %v1194, %v1289
    %v1294 = vlaneseq
    %v1295 = vshrl.u32 %v1294, 7
    %v1296 = vsub.s32 1, %v1295
    %v1297 = vrot.slane %v93, %v1296
    %v1299 = vsel %vm154, %v1290, 0
    %v1302 = vsel %vm154, %v1291, 0
    %v1305 = vsel %vm154, %v1292, 0
    %v1308 = vsel %vm154, %v1293, 0
    %1310 = vmatprep.subr.mxu0 0.0
    %1311 = vmatpush1.msra.mxu0 %v733
    %1312 = vmatprep.subr.mxu0 0.0
    %1313 = vmatpush1.msra.mxu0 %v734
    %1314 = vmatprep.subr.mxu0 0.0
    %1315 = vmatpush1.msra.mxu0 %v735
    %1316 = vmatprep.subr.mxu0 0.0
    %1317 = vmatpush1.msra.mxu0 %v736
    %1318 = vmatprep.subr.mxu0 0.0
    %1319 = vmatpush1.msra.mxu0 0.0
    %1320 = vmatprep.subr.mxu0 0.0
    %1321 = vmatpush1.msra.mxu0 0.0
    %1322 = vmatprep.subr.mxu0 0.0
    %1323 = vmatpush1.msra.mxu0 0.0
    %1324 = vmatprep.subr.mxu0 0.0
    %1325 = vmatpush1.msra.mxu0 0.0
    %1326 = vmatprep.subr.mxu0 0.0
    %1327 = vmatpush1.msra.mxu0 0.0
    %1328 = vmatprep.subr.mxu0 0.0
    %1329 = vmatpush1.msra.mxu0 0.0
    %1330 = vmatprep.subr.mxu0 0.0
    %1331 = vmatpush1.msra.mxu0 0.0
    %1332 = vmatprep.subr.mxu0 0.0
    %1333 = vmatpush1.msra.mxu0 0.0
    %1334 = vmatprep.subr.mxu0 0.0
    %1335 = vmatpush1.msra.mxu0 0.0
    %1336 = vmatprep.subr.mxu0 0.0
    %1337 = vmatpush1.msra.mxu0 0.0
    %1338 = vmatprep.subr.mxu0 0.0
    %1339 = vmatpush1.msra.mxu0 0.0
    %1340 = vmatprep.subr.mxu0 0.0
    %1341 = vmatpush1.msra.mxu0 0.0
    %1342 = vmatprep.subr.mxu0 0.0
    %1343 = vmatpush1.msra.mxu0 0.0
    %1344 = vmatprep.subr.mxu0 0.0
    %1345 = vmatpush1.msra.mxu0 0.0
    %1346 = vmatprep.subr.mxu0 0.0
    %1347 = vmatpush1.msra.mxu0 0.0
    %1348 = vmatprep.subr.mxu0 0.0
    %1349 = vmatpush1.msra.mxu0 0.0
    %1350 = vmatprep.subr.mxu0 0.0
    %1351 = vmatpush1.msra.mxu0 0.0
    %1352 = vmatprep.subr.mxu0 0.0
    %1353 = vmatpush1.msra.mxu0 0.0
    %1354 = vmatprep.subr.mxu0 0.0
    %1355 = vmatpush1.msra.mxu0 0.0
    %1356 = vmatprep.subr.mxu0 0.0
    %1357 = vmatpush1.msra.mxu0 0.0
    %1358 = vmatprep.subr.mxu0 0.0
    %1359 = vmatpush1.msra.mxu0 0.0
    %1360 = vmatprep.subr.mxu0 0.0
    %1361 = vmatpush1.msra.mxu0 0.0
    %1362 = vmatprep.subr.mxu0 0.0
    %1363 = vmatpush1.msra.mxu0 0.0
    %1364 = vmatprep.subr.mxu0 0.0
    %1365 = vmatpush1.msra.mxu0 0.0
    %1366 = vmatprep.subr.mxu0 0.0
    %1367 = vmatpush1.msra.mxu0 0.0
    %1368 = vmatprep.subr.mxu0 0.0
    %1369 = vmatpush1.msra.mxu0 0.0
    %1370 = vmatprep.subr.mxu0 0.0
    %1371 = vmatpush1.msra.mxu0 0.0
    %1372 = vmatprep.subr.mxu0 0.0
    %1373 = vmatpush1.msra.mxu0 0.0
    %1374 = vmatprep.mubr.f32.mxu0 0.0
    %1375 = vmatmul.mubr.f32.gmra.mrb[0].mxu0 %v1299
    %v1376 = vpop.f32.mrb[0].mxu0
    %v1377 = vadd.f32 %v1297, %v1376
    %v1378 = vpop.f32.mrb[0].mxu0
    %1379 = vmatprep.mubr.f32.mxu0 0.0
    %1380 = vmatmul.mubr.f32.gmra.mrb[0].mxu0 %v1302
    %v1381 = vpop.f32.mrb[0].mxu0
    %v1382 = vadd.f32 %v1297, %v1381
    %v1383 = vpop.f32.mrb[0].mxu0
    %1384 = vmatprep.mubr.f32.mxu0 0.0
    %1385 = vmatmul.mubr.f32.gmra.mrb[0].mxu0 %v1305
    %v1386 = vpop.f32.mrb[0].mxu0
    %v1387 = vadd.f32 %v1297, %v1386
    %v1388 = vpop.f32.mrb[0].mxu0
    %1389 = vmatprep.mubr.f32.mxu0 0.0
    %1390 = vmatmul.mubr.f32.gmra.mrb[0].mxu0 %v1308
    %v1391 = vpop.f32.mrb[0].mxu0
    %v1392 = vadd.f32 %v1297, %v1391
    %v1393 = vpop.f32.mrb[0].mxu0
    %1394 = vdwg.mxu0
    %v1395 = vadd.f32 %v1377, %v456
    %v1396 = vadd.f32 %v1382, %v461
    %v1397 = vadd.f32 %v1387, %v466
    %v1398 = vadd.f32 %v1392, %v471
    %v1399 = vsel %vm154, %v1395, 0.0
    %1400 = vadd.xlane.f32.xlu0 %v1399
    %v1401 = vpop.xlane.xlu0 %1400
    %v1402 = vsel %vm154, %v1396, 0.0
    %1403 = vadd.xlane.f32.xlu0 %v1402
    %v1404 = vpop.xlane.xlu0 %1403
    %v1405 = vsel %vm154, %v1397, 0.0
    %1406 = vadd.xlane.f32.xlu0 %v1405
    %v1407 = vpop.xlane.xlu0 %1406
    %v1408 = vsel %vm154, %v1398, 0.0
    %1409 = vadd.xlane.f32.xlu0 %v1408
    %v1410 = vpop.xlane.xlu0 %1409
    %v1411 = vmul.f32 %v1401, %v486
    %v1412 = vmul.f32 %v1404, %v486
    %v1413 = vmul.f32 %v1407, %v486
    %v1414 = vmul.f32 %v1410, %v486
    %v1415 = vsub.f32 %v1395, %v1411
    %v1416 = vsub.f32 %v1396, %v1412
    %v1417 = vsub.f32 %v1397, %v1413
    %v1418 = vsub.f32 %v1398, %v1414
    %v1419 = vmul.f32 %v1415, %v1415
    %v1420 = vmul.f32 %v1416, %v1416
    %v1421 = vmul.f32 %v1417, %v1417
    %v1422 = vmul.f32 %v1418, %v1418
    %v1423 = vsel %vm154, %v1419, 0.0
    %1424 = vadd.xlane.f32.xlu0 %v1423
    %v1425 = vpop.xlane.xlu0 %1424
    %v1426 = vsel %vm154, %v1420, 0.0
    %1427 = vadd.xlane.f32.xlu0 %v1426
    %v1428 = vpop.xlane.xlu0 %1427
    %v1429 = vsel %vm154, %v1421, 0.0
    %1430 = vadd.xlane.f32.xlu0 %v1429
    %v1431 = vpop.xlane.xlu0 %1430
    %v1432 = vsel %vm154, %v1422, 0.0
    %1433 = vadd.xlane.f32.xlu0 %v1432
    %v1434 = vpop.xlane.xlu0 %1433
    %v1435 = vmul.f32 %v1425, %v486
    %v1436 = vmul.f32 %v1428, %v486
    %v1437 = vmul.f32 %v1431, %v486
    %v1438 = vmul.f32 %v1434, %v486
    %v1439 = vadd.f32 %v1435, 1e-05
    %v1440 = vadd.f32 %v1436, 1e-05
    %v1441 = vadd.f32 %v1437, 1e-05
    %v1442 = vadd.f32 %v1438, 1e-05
    %v1443 = vrsqrt.pop %v1439
    %v1444 = vrsqrt.pop %v1440
    %v1445 = vrsqrt.pop %v1441
    %v1446 = vrsqrt.pop %v1442
    %v1447 = vmul.f32 %v1415, %v1443
    %v1448 = vmul.f32 %v1416, %v1444
    %v1449 = vmul.f32 %v1417, %v1445
    %v1450 = vmul.f32 %v1418, %v1446
    %v1451 = vlaneseq
    %v1452 = vshrl.u32 %v1451, 7
    %v1453 = vsub.s32 5, %v1452
    %v1454 = vrot.slane %v92, %v1453
    %v1455 = vmul.f32 %v1447, %v1454
    %v1456 = vmul.f32 %v1448, %v1454
    %v1457 = vmul.f32 %v1449, %v1454
    %v1458 = vmul.f32 %v1450, %v1454
    %v1459 = vlaneseq
    %v1460 = vshrl.u32 %v1459, 7
    %v1461 = vsub.s32 6, %v1460
    %v1462 = vrot.slane %v92, %v1461
    %v1463 = vadd.f32 %v1455, %v1462
    %v1464 = vadd.f32 %v1456, %v1462
    %v1465 = vadd.f32 %v1457, %v1462
    %v1466 = vadd.f32 %v1458, %v1462
    %v1467 = vld [vmem:[%s2 + $0x20] sm:$0xff]
    %v1468 = vld [vmem:[%s2 + $0x70] sm:$0xff]
    %v1469 = vld [vmem:[%s2 + $0xc0] sm:$0xff]
    %v1470 = vld [vmem:[%s2 + $0x110] sm:$0xff]
    %v1472 = vsel %vm154, %v1463, 0
    %v1475 = vsel %vm154, %v1464, 0
    %v1478 = vsel %vm154, %v1465, 0
    %v1481 = vsel %vm154, %v1466, 0
    %1483 = vmatprep.subr.mxu0 0.0
    %1484 = vmatpush1.msra.mxu0 %v1467
    %1485 = vmatprep.subr.mxu0 0.0
    %1486 = vmatpush1.msra.mxu0 %v1468
    %1487 = vmatprep.subr.mxu0 0.0
    %1488 = vmatpush1.msra.mxu0 %v1469
    %1489 = vmatprep.subr.mxu0 0.0
    %1490 = vmatpush1.msra.mxu0 %v1470
    %1491 = vmatprep.subr.mxu0 0.0
    %1492 = vmatpush1.msra.mxu0 0.0
    %1493 = vmatprep.subr.mxu0 0.0
    %1494 = vmatpush1.msra.mxu0 0.0
    %1495 = vmatprep.subr.mxu0 0.0
    %1496 = vmatpush1.msra.mxu0 0.0
    %1497 = vmatprep.subr.mxu0 0.0
    %1498 = vmatpush1.msra.mxu0 0.0
    %1499 = vmatprep.subr.mxu0 0.0
    %1500 = vmatpush1.msra.mxu0 0.0
    %1501 = vmatprep.subr.mxu0 0.0
    %1502 = vmatpush1.msra.mxu0 0.0
    %1503 = vmatprep.subr.mxu0 0.0
    %1504 = vmatpush1.msra.mxu0 0.0
    %1505 = vmatprep.subr.mxu0 0.0
    %1506 = vmatpush1.msra.mxu0 0.0
    %1507 = vmatprep.subr.mxu0 0.0
    %1508 = vmatpush1.msra.mxu0 0.0
    %1509 = vmatprep.subr.mxu0 0.0
    %1510 = vmatpush1.msra.mxu0 0.0
    %1511 = vmatprep.subr.mxu0 0.0
    %1512 = vmatpush1.msra.mxu0 0.0
    %1513 = vmatprep.subr.mxu0 0.0
    %1514 = vmatpush1.msra.mxu0 0.0
    %1515 = vmatprep.subr.mxu0 0.0
    %1516 = vmatpush1.msra.mxu0 0.0
    %1517 = vmatprep.subr.mxu0 0.0
    %1518 = vmatpush1.msra.mxu0 0.0
    %1519 = vmatprep.subr.mxu0 0.0
    %1520 = vmatpush1.msra.mxu0 0.0
    %1521 = vmatprep.subr.mxu0 0.0
    %1522 = vmatpush1.msra.mxu0 0.0
    %1523 = vmatprep.subr.mxu0 0.0
    %1524 = vmatpush1.msra.mxu0 0.0
    %1525 = vmatprep.subr.mxu0 0.0
    %1526 = vmatpush1.msra.mxu0 0.0
    %1527 = vmatprep.subr.mxu0 0.0
    %1528 = vmatpush1.msra.mxu0 0.0
    %1529 = vmatprep.subr.mxu0 0.0
    %1530 = vmatpush1.msra.mxu0 0.0
    %1531 = vmatprep.subr.mxu0 0.0
    %1532 = vmatpush1.msra.mxu0 0.0
    %1533 = vmatprep.subr.mxu0 0.0
    %1534 = vmatpush1.msra.mxu0 0.0
    %1535 = vmatprep.subr.mxu0 0.0
    %1536 = vmatpush1.msra.mxu0 0.0
    %1537 = vmatprep.subr.mxu0 0.0
    %1538 = vmatpush1.msra.mxu0 0.0
    %1539 = vmatprep.subr.mxu0 0.0
    %1540 = vmatpush1.msra.mxu0 0.0
    %1541 = vmatprep.subr.mxu0 0.0
    %1542 = vmatpush1.msra.mxu0 0.0
    %1543 = vmatprep.subr.mxu0 0.0
    %1544 = vmatpush1.msra.mxu0 0.0
    %1545 = vmatprep.subr.mxu0 0.0
    %1546 = vmatpush1.msra.mxu0 0.0
    %1547 = vmatprep.mubr.f32.mxu0 0.0
    %1548 = vmatmul.mubr.f32.gmra.mrb[0].mxu0 %v1472
    %v1549 = vpop.f32.mrb[0].mxu0
    %v1550 = vadd.f32 0.0, %v1549
    %v1551 = vpop.f32.mrb[0].mxu0
    %1552 = vmatprep.mubr.f32.mxu0 0.0
    %1553 = vmatmul.mubr.f32.gmra.mrb[0].mxu0 %v1475
    %v1554 = vpop.f32.mrb[0].mxu0
    %v1555 = vadd.f32 0.0, %v1554
    %v1556 = vpop.f32.mrb[0].mxu0
    %1557 = vmatprep.mubr.f32.mxu0 0.0
    %1558 = vmatmul.mubr.f32.gmra.mrb[0].mxu0 %v1478
    %v1559 = vpop.f32.mrb[0].mxu0
    %v1560 = vadd.f32 0.0, %v1559
    %v1561 = vpop.f32.mrb[0].mxu0
    %1562 = vmatprep.mubr.f32.mxu0 0.0
    %1563 = vmatmul.mubr.f32.gmra.mrb[0].mxu0 %v1481
    %v1564 = vpop.f32.mrb[0].mxu0
    %v1565 = vadd.f32 0.0, %v1564
    %v1566 = vpop.f32.mrb[0].mxu0
    %1567 = vdwg.mxu0
    %v1568 = vld [vmem:[#allocation5] sm:$0xff]
    %v1569 = vld [vmem:[#allocation5 + $0x8] sm:$0xff]
    %v1570 = vld [vmem:[%s2 + $0x28] sm:$0xff]
    %v1571 = vld [vmem:[%s2 + $0x78] sm:$0xff]
    %v1572 = vld [vmem:[%s2 + $0xc8] sm:$0xff]
    %v1573 = vld [vmem:[%s2 + $0x118] sm:$0xff]
    %v1575 = vsel %vm154, %v1568, 0
    %v1578 = vsel %vm154, %v1569, 0
    %1580 = vmatprep.subr.mxu0 0.0
    %1581 = vmatpush1.msra.mxu0 %v1570
    %1582 = vmatprep.subr.mxu0 0.0
    %1583 = vmatpush1.msra.mxu0 %v1571
    %1584 = vmatprep.subr.mxu0 0.0
    %1585 = vmatpush1.msra.mxu0 %v1572
    %1586 = vmatprep.subr.mxu0 0.0
    %1587 = vmatpush1.msra.mxu0 %v1573
    %1588 = vmatprep.subr.mxu0 0.0
    %1589 = vmatpush1.msra.mxu0 0.0
    %1590 = vmatprep.subr.mxu0 0.0
    %1591 = vmatpush1.msra.mxu0 0.0
    %1592 = vmatprep.subr.mxu0 0.0
    %1593 = vmatpush1.msra.mxu0 0.0
    %1594 = vmatprep.subr.mxu0 0.0
    %1595 = vmatpush1.msra.mxu0 0.0
    %1596 = vmatprep.subr.mxu0 0.0
    %1597 = vmatpush1.msra.mxu0 0.0
    %1598 = vmatprep.subr.mxu0 0.0
    %1599 = vmatpush1.msra.mxu0 0.0
    %1600 = vmatprep.subr.mxu0 0.0
    %1601 = vmatpush1.msra.mxu0 0.0
    %1602 = vmatprep.subr.mxu0 0.0
    %1603 = vmatpush1.msra.mxu0 0.0
    %1604 = vmatprep.subr.mxu0 0.0
    %1605 = vmatpush1.msra.mxu0 0.0
    %1606 = vmatprep.subr.mxu0 0.0
    %1607 = vmatpush1.msra.mxu0 0.0
    %1608 = vmatprep.subr.mxu0 0.0
    %1609 = vmatpush1.msra.mxu0 0.0
    %1610 = vmatprep.subr.mxu0 0.0
    %1611 = vmatpush1.msra.mxu0 0.0
    %1612 = vmatprep.subr.mxu0 0.0
    %1613 = vmatpush1.msra.mxu0 0.0
    %1614 = vmatprep.subr.mxu0 0.0
    %1615 = vmatpush1.msra.mxu0 0.0
    %1616 = vmatprep.subr.mxu0 0.0
    %1617 = vmatpush1.msra.mxu0 0.0
    %1618 = vmatprep.subr.mxu0 0.0
    %1619 = vmatpush1.msra.mxu0 0.0
    %1620 = vmatprep.subr.mxu0 0.0
    %1621 = vmatpush1.msra.mxu0 0.0
    %1622 = vmatprep.subr.mxu0 0.0
    %1623 = vmatpush1.msra.mxu0 0.0
    %1624 = vmatprep.subr.mxu0 0.0
    %1625 = vmatpush1.msra.mxu0 0.0
    %1626 = vmatprep.subr.mxu0 0.0
    %1627 = vmatpush1.msra.mxu0 0.0
    %1628 = vmatprep.subr.mxu0 0.0
    %1629 = vmatpush1.msra.mxu0 0.0
    %1630 = vmatprep.subr.mxu0 0.0
    %1631 = vmatpush1.msra.mxu0 0.0
    %1632 = vmatprep.subr.mxu0 0.0
    %1633 = vmatpush1.msra.mxu0 0.0
    %1634 = vmatprep.subr.mxu0 0.0
    %1635 = vmatpush1.msra.mxu0 0.0
    %1636 = vmatprep.subr.mxu0 0.0
    %1637 = vmatpush1.msra.mxu0 0.0
    %1638 = vmatprep.subr.mxu0 0.0
    %1639 = vmatpush1.msra.mxu0 0.0
    %1640 = vmatprep.subr.mxu0 0.0
    %1641 = vmatpush1.msra.mxu0 0.0
    %1642 = vmatprep.subr.mxu0 0.0
    %1643 = vmatpush1.msra.mxu0 0.0
    %1644 = vmatprep.mubr.f32.mxu0 0.0
    %1645 = vmatmul.mubr.f32.gmra.mrb[0].mxu0 %v1575
    %v1646 = vpop.f32.mrb[0].mxu0
    %v1647 = vadd.f32 0.0, %v1646
    %v1648 = vpop.f32.mrb[0].mxu0
    %1649 = vmatprep.mubr.f32.mxu0 0.0
    %1650 = vmatmul.mubr.f32.gmra.mrb[0].mxu0 %v1578
    %v1651 = vpop.f32.mrb[0].mxu0
    %v1652 = vadd.f32 0.0, %v1651
    %v1653 = vpop.f32.mrb[0].mxu0
    %1654 = vdwg.mxu0
    %v1655 = vld [vmem:[%s2 + $0x30] sm:$0xff]
    %v1656 = vld [vmem:[%s2 + $0x80] sm:$0xff]
    %v1657 = vld [vmem:[%s2 + $0xd0] sm:$0xff]
    %v1658 = vld [vmem:[%s2 + $0x120] sm:$0xff]
    %vm1659 = vcmask 130048
    %v1661 = vsel %vm1659, %v146, 0
    %v1664 = vsel %vm1659, %v147, 0
    %v1667 = vsel %vm1659, %v148, 0
    %v1670 = vsel %vm1659, %v149, 0
    %v1673 = vsel %vm1659, %v150, 0
    %v1676 = vsel %vm1659, %v151, 0
    %v1679 = vsel %vm1659, %v152, 0
    %v1682 = vsel %vm1659, %v153, 0
    %1684 = vmatprep.subr.mxu0 0.0
    %1685 = vmatpush1.msra.mxu0 %v1647
    %1686 = vmatprep.subr.mxu0 0.0
    %1687 = vmatpush1.msra.mxu0 %v1652
    %1688 = vmatprep.subr.mxu0 0.0
    %1689 = vmatpush1.msra.mxu0 0.0
    %1690 = vmatprep.subr.mxu0 0.0
    %1691 = vmatpush1.msra.mxu0 0.0
    %1692 = vmatprep.subr.mxu0 0.0
    %1693 = vmatpush1.msra.mxu0 0.0
    %1694 = vmatprep.subr.mxu0 0.0
    %1695 = vmatpush1.msra.mxu0 0.0
    %1696 = vmatprep.subr.mxu0 0.0
    %1697 = vmatpush1.msra.mxu0 0.0
    %1698 = vmatprep.subr.mxu0 0.0
    %1699 = vmatpush1.msra.mxu0 0.0
    %1700 = vmatprep.subr.mxu0 0.0
    %1701 = vmatpush1.msra.mxu0 0.0
    %1702 = vmatprep.subr.mxu0 0.0
    %1703 = vmatpush1.msra.mxu0 0.0
    %1704 = vmatprep.subr.mxu0 0.0
    %1705 = vmatpush1.msra.mxu0 0.0
    %1706 = vmatprep.subr.mxu0 0.0
    %1707 = vmatpush1.msra.mxu0 0.0
    %1708 = vmatprep.subr.mxu0 0.0
    %1709 = vmatpush1.msra.mxu0 0.0
    %1710 = vmatprep.subr.mxu0 0.0
    %1711 = vmatpush1.msra.mxu0 0.0
    %1712 = vmatprep.subr.mxu0 0.0
    %1713 = vmatpush1.msra.mxu0 0.0
    %1714 = vmatprep.subr.mxu0 0.0
    %1715 = vmatpush1.msra.mxu0 0.0
    %1716 = vmatprep.subr.mxu0 0.0
    %1717 = vmatpush1.msra.mxu0 0.0
    %1718 = vmatprep.subr.mxu0 0.0
    %1719 = vmatpush1.msra.mxu0 0.0
    %1720 = vmatprep.subr.mxu0 0.0
    %1721 = vmatpush1.msra.mxu0 0.0
    %1722 = vmatprep.subr.mxu0 0.0
    %1723 = vmatpush1.msra.mxu0 0.0
    %1724 = vmatprep.subr.mxu0 0.0
    %1725 = vmatpush1.msra.mxu0 0.0
    %1726 = vmatprep.subr.mxu0 0.0
    %1727 = vmatpush1.msra.mxu0 0.0
    %1728 = vmatprep.subr.mxu0 0.0
    %1729 = vmatpush1.msra.mxu0 0.0
    %1730 = vmatprep.subr.mxu0 0.0
    %1731 = vmatpush1.msra.mxu0 0.0
    %1732 = vmatprep.subr.mxu0 0.0
    %1733 = vmatpush1.msra.mxu0 0.0
    %1734 = vmatprep.subr.mxu0 0.0
    %1735 = vmatpush1.msra.mxu0 0.0
    %1736 = vmatprep.subr.mxu0 0.0
    %1737 = vmatpush1.msra.mxu0 0.0
    %1738 = vmatprep.subr.mxu0 0.0
    %1739 = vmatpush1.msra.mxu0 0.0
    %1740 = vmatprep.subr.mxu0 0.0
    %1741 = vmatpush1.msra.mxu0 0.0
    %1742 = vmatprep.subr.mxu0 0.0
    %1743 = vmatpush1.msra.mxu0 0.0
    %1744 = vmatprep.subr.mxu0 0.0
    %1745 = vmatpush1.msra.mxu0 0.0
    %1746 = vmatprep.subr.mxu0 0.0
    %1747 = vmatpush1.msra.mxu0 0.0
    %1748 = vmatprep.mubr.f32.mxu0 0.0
    %1749 = vmatmul.mubr.f32.gmra.mrb[0].mxu0 %v1661
    %v1750 = vpop.f32.mrb[0].mxu0
    %v1751 = vadd.f32 0.0, %v1750
    %v1752 = vpop.f32.mrb[0].mxu0
    %1753 = vmatprep.mubr.f32.mxu0 0.0
    %1754 = vmatmul.mubr.f32.gmra.mrb[0].mxu0 %v1664
    %v1755 = vpop.f32.mrb[0].mxu0
    %v1756 = vadd.f32 0.0, %v1755
    %v1757 = vpop.f32.mrb[0].mxu0
    %1758 = vmatprep.mubr.f32.mxu0 0.0
    %1759 = vmatmul.mubr.f32.gmra.mrb[0].mxu0 %v1667
    %v1760 = vpop.f32.mrb[0].mxu0
    %v1761 = vadd.f32 0.0, %v1760
    %v1762 = vpop.f32.mrb[0].mxu0
    %1763 = vmatprep.mubr.f32.mxu0 0.0
    %1764 = vmatmul.mubr.f32.gmra.mrb[0].mxu0 %v1670
    %v1765 = vpop.f32.mrb[0].mxu0
    %v1766 = vadd.f32 0.0, %v1765
    %v1767 = vpop.f32.mrb[0].mxu0
    %1768 = vmatprep.mubr.f32.mxu0 0.0
    %1769 = vmatmul.mubr.f32.gmra.mrb[0].mxu0 %v1673
    %v1770 = vpop.f32.mrb[0].mxu0
    %v1771 = vadd.f32 0.0, %v1770
    %v1772 = vpop.f32.mrb[0].mxu0
    %1773 = vmatprep.mubr.f32.mxu0 0.0
    %1774 = vmatmul.mubr.f32.gmra.mrb[0].mxu0 %v1676
    %v1775 = vpop.f32.mrb[0].mxu0
    %v1776 = vadd.f32 0.0, %v1775
    %v1777 = vpop.f32.mrb[0].mxu0
    %1778 = vmatprep.mubr.f32.mxu0 0.0
    %1779 = vmatmul.mubr.f32.gmra.mrb[0].mxu0 %v1679
    %v1780 = vpop.f32.mrb[0].mxu0
    %v1781 = vadd.f32 0.0, %v1780
    %v1782 = vpop.f32.mrb[0].mxu0
    %1783 = vmatprep.mubr.f32.mxu0 0.0
    %1784 = vmatmul.mubr.f32.gmra.mrb[0].mxu0 %v1682
    %v1785 = vpop.f32.mrb[0].mxu0
    %v1786 = vadd.f32 0.0, %v1785
    %v1787 = vpop.f32.mrb[0].mxu0
    %1788 = vdwg.mxu0
    %v1789 = vmul.f32 %v1751, %v138
    %v1790 = vmul.f32 %v1756, %v139
    %v1791 = vmul.f32 %v1761, %v140
    %v1792 = vmul.f32 %v1766, %v141
    %v1793 = vmul.f32 %v1771, %v142
    %v1794 = vmul.f32 %v1776, %v143
    %v1795 = vmul.f32 %v1781, %v144
    %v1796 = vmul.f32 %v1786, %v145
    %v1798 = vsel %vm946, %v1550, 0
    %v1801 = vsel %vm946, %v1555, 0
    %v1804 = vsel %vm946, %v1560, 0
    %v1807 = vsel %vm946, %v1565, 0
    %v1810 = vsel %vm946, %v1789, 0
    %v1813 = vsel %vm946, %v1790, 0
    %v1816 = vsel %vm946, %v1791, 0
    %v1819 = vsel %vm946, %v1792, 0
    %v1822 = vsel %vm946, %v1793, 0
    %v1825 = vsel %vm946, %v1794, 0
    %v1828 = vsel %vm946, %v1795, 0
    %v1831 = vsel %vm946, %v1796, 0
    %1833 = vmatprep.subr.mxu0 0.0
    %1834 = vmatpush1.xpose.msra.mxu0 %v1810
    %1835 = vmatprep.subr.mxu0 0.0
    %1836 = vmatpush1.xpose.msra.mxu0 %v1813
    %1837 = vmatprep.subr.mxu0 0.0
    %1838 = vmatpush1.xpose.msra.mxu0 %v1816
    %1839 = vmatprep.subr.mxu0 0.0
    %1840 = vmatpush1.xpose.msra.mxu0 %v1819
    %1841 = vmatprep.subr.mxu0 0.0
    %1842 = vmatpush1.xpose.msra.mxu0 %v1822
    %1843 = vmatprep.subr.mxu0 0.0
    %1844 = vmatpush1.xpose.msra.mxu0 %v1825
    %1845 = vmatprep.subr.mxu0 0.0
    %1846 = vmatpush1.xpose.msra.mxu0 %v1828
    %1847 = vmatprep.subr.mxu0 0.0
    %1848 = vmatpush1.xpose.msra.mxu0 %v1831
    %1849 = vmatprep.subr.mxu0 0.0
    %1850 = vmatpush1.xpose.msra.mxu0 0.0
    %1851 = vmatprep.subr.mxu0 0.0
    %1852 = vmatpush1.xpose.msra.mxu0 0.0
    %1853 = vmatprep.subr.mxu0 0.0
    %1854 = vmatpush1.xpose.msra.mxu0 0.0
    %1855 = vmatprep.subr.mxu0 0.0
    %1856 = vmatpush1.xpose.msra.mxu0 0.0
    %1857 = vmatprep.subr.mxu0 0.0
    %1858 = vmatpush1.xpose.msra.mxu0 0.0
    %1859 = vmatprep.subr.mxu0 0.0
    %1860 = vmatpush1.xpose.msra.mxu0 0.0
    %1861 = vmatprep.subr.mxu0 0.0
    %1862 = vmatpush1.xpose.msra.mxu0 0.0
    %1863 = vmatprep.subr.mxu0 0.0
    %1864 = vmatpush1.xpose.msra.mxu0 0.0
    %1865 = vmatprep.subr.mxu0 0.0
    %1866 = vmatpush1.xpose.msra.mxu0 0.0
    %1867 = vmatprep.subr.mxu0 0.0
    %1868 = vmatpush1.xpose.msra.mxu0 0.0
    %1869 = vmatprep.subr.mxu0 0.0
    %1870 = vmatpush1.xpose.msra.mxu0 0.0
    %1871 = vmatprep.subr.mxu0 0.0
    %1872 = vmatpush1.xpose.msra.mxu0 0.0
    %1873 = vmatprep.subr.mxu0 0.0
    %1874 = vmatpush1.xpose.msra.mxu0 0.0
    %1875 = vmatprep.subr.mxu0 0.0
    %1876 = vmatpush1.xpose.msra.mxu0 0.0
    %1877 = vmatprep.subr.mxu0 0.0
    %1878 = vmatpush1.xpose.msra.mxu0 0.0
    %1879 = vmatprep.subr.mxu0 0.0
    %1880 = vmatpush1.xpose.msra.mxu0 0.0
    %1881 = vmatprep.subr.mxu0 0.0
    %1882 = vmatpush1.xpose.msra.mxu0 0.0
    %1883 = vmatprep.subr.mxu0 0.0
    %1884 = vmatpush1.xpose.msra.mxu0 0.0
    %1885 = vmatprep.subr.mxu0 0.0
    %1886 = vmatpush1.xpose.msra.mxu0 0.0
    %1887 = vmatprep.subr.mxu0 0.0
    %1888 = vmatpush1.xpose.msra.mxu0 0.0
    %1889 = vmatprep.subr.mxu0 0.0
    %1890 = vmatpush1.xpose.msra.mxu0 0.0
    %1891 = vmatprep.subr.mxu0 0.0
    %1892 = vmatpush1.xpose.msra.mxu0 0.0
    %1893 = vmatprep.subr.mxu0 0.0
    %1894 = vmatpush1.xpose.msra.mxu0 0.0
    %1895 = vmatprep.subr.mxu0 0.0
    %1896 = vmatpush1.xpose.msra.mxu0 0.0
    %1897 = vmatprep.mubr.f32.mxu0 0.0
    %1898 = vmatmul.mubr.f32.gmra.mrb[0].mxu0 %v1798
    %v1899 = vpop.f32.mrb[0].mxu0
    %v1900 = vadd.f32 %v102, %v1899
    %v1901 = vpop.f32.mrb[0].mxu0
    %1902 = vmatprep.mubr.f32.mxu0 0.0
    %1903 = vmatmul.mubr.f32.gmra.mrb[0].mxu0 %v1801
    %v1904 = vpop.f32.mrb[0].mxu0
    %v1905 = vadd.f32 %v103, %v1904
    %v1906 = vpop.f32.mrb[0].mxu0
    %1907 = vmatprep.mubr.f32.mxu0 0.0
    %1908 = vmatmul.mubr.f32.gmra.mrb[0].mxu0 %v1804
    %v1909 = vpop.f32.mrb[0].mxu0
    %v1910 = vadd.f32 %v104, %v1909
    %v1911 = vpop.f32.mrb[0].mxu0
    %1912 = vmatprep.mubr.f32.mxu0 0.0
    %1913 = vmatmul.mubr.f32.gmra.mrb[0].mxu0 %v1807
    %v1914 = vpop.f32.mrb[0].mxu0
    %v1915 = vadd.f32 %v105, %v1914
    %v1916 = vpop.f32.mrb[0].mxu0
    %1917 = vdwg.mxu0
    %v1918 = vsel %vm946, %v1900, -inf
    %1919 = vmax.xlane.f32.xlu0 %v1918
    %v1920 = vpop.xlane.xlu0 %1919
    %v1921 = vsel %vm946, %v1905, -inf
    %1922 = vmax.xlane.f32.xlu0 %v1921
    %v1923 = vpop.xlane.xlu0 %1922
    %v1924 = vsel %vm946, %v1910, -inf
    %1925 = vmax.xlane.f32.xlu0 %v1924
    %v1926 = vpop.xlane.xlu0 %1925
    %v1927 = vsel %vm946, %v1915, -inf
    %1928 = vmax.xlane.f32.xlu0 %v1927
    %v1929 = vpop.xlane.xlu0 %1928
    %v1930 = vsub.f32 %v1900, %v1920
    %v1931 = vsub.f32 %v1905, %v1923
    %v1932 = vsub.f32 %v1910, %v1926
    %v1933 = vsub.f32 %v1915, %v1929
    %v1934 = vmul.f32 %v1930, 1.442695
    %v1935 = vpow.pop %v1934
    %v1936 = vmul.f32 %v1931, 1.442695
    %v1937 = vpow.pop %v1936
    %v1938 = vmul.f32 %v1932, 1.442695
    %v1939 = vpow.pop %v1938
    %v1940 = vmul.f32 %v1933, 1.442695
    %v1941 = vpow.pop %v1940
    %v1943 = vsel %vm946, %v1935, 0
    %v1946 = vsel %vm946, %v1937, 0
    %v1949 = vsel %vm946, %v1939, 0
    %v1952 = vsel %vm946, %v1941, 0
    %1954 = vmatprep.subr.mxu0 0.0
    %1955 = vmatpush1.msra.mxu0 %v1789
    %1956 = vmatprep.subr.mxu0 0.0
    %1957 = vmatpush1.msra.mxu0 %v1790
    %1958 = vmatprep.subr.mxu0 0.0
    %1959 = vmatpush1.msra.mxu0 %v1791
    %1960 = vmatprep.subr.mxu0 0.0
    %1961 = vmatpush1.msra.mxu0 %v1792
    %1962 = vmatprep.subr.mxu0 0.0
    %1963 = vmatpush1.msra.mxu0 %v1793
    %1964 = vmatprep.subr.mxu0 0.0
    %1965 = vmatpush1.msra.mxu0 %v1794
    %1966 = vmatprep.subr.mxu0 0.0
    %1967 = vmatpush1.msra.mxu0 %v1795
    %1968 = vmatprep.subr.mxu0 0.0
    %1969 = vmatpush1.msra.mxu0 %v1796
    %1970 = vmatprep.subr.mxu0 0.0
    %1971 = vmatpush1.msra.mxu0 0.0
    %1972 = vmatprep.subr.mxu0 0.0
    %1973 = vmatpush1.msra.mxu0 0.0
    %1974 = vmatprep.subr.mxu0 0.0
    %1975 = vmatpush1.msra.mxu0 0.0
    %1976 = vmatprep.subr.mxu0 0.0
    %1977 = vmatpush1.msra.mxu0 0.0
    %1978 = vmatprep.subr.mxu0 0.0
    %1979 = vmatpush1.msra.mxu0 0.0
    %1980 = vmatprep.subr.mxu0 0.0
    %1981 = vmatpush1.msra.mxu0 0.0
    %1982 = vmatprep.subr.mxu0 0.0
    %1983 = vmatpush1.msra.mxu0 0.0
    %1984 = vmatprep.subr.mxu0 0.0
    %1985 = vmatpush1.msra.mxu0 0.0
    %1986 = vmatprep.subr.mxu0 0.0
    %1987 = vmatpush1.msra.mxu0 0.0
    %1988 = vmatprep.subr.mxu0 0.0
    %1989 = vmatpush1.msra.mxu0 0.0
    %1990 = vmatprep.subr.mxu0 0.0
    %1991 = vmatpush1.msra.mxu0 0.0
    %1992 = vmatprep.subr.mxu0 0.0
    %1993 = vmatpush1.msra.mxu0 0.0
    %1994 = vmatprep.subr.mxu0 0.0
    %1995 = vmatpush1.msra.mxu0 0.0
    %1996 = vmatprep.subr.mxu0 0.0
    %1997 = vmatpush1.msra.mxu0 0.0
    %1998 = vmatprep.subr.mxu0 0.0
    %1999 = vmatpush1.msra.mxu0 0.0
    %2000 = vmatprep.subr.mxu0 0.0
    %2001 = vmatpush1.msra.mxu0 0.0
    %2002 = vmatprep.subr.mxu0 0.0
    %2003 = vmatpush1.msra.mxu0 0.0
    %2004 = vmatprep.subr.mxu0 0.0
    %2005 = vmatpush1.msra.mxu0 0.0
    %2006 = vmatprep.subr.mxu0 0.0
    %2007 = vmatpush1.msra.mxu0 0.0
    %2008 = vmatprep.subr.mxu0 0.0
    %2009 = vmatpush1.msra.mxu0 0.0
    %2010 = vmatprep.subr.mxu0 0.0
    %2011 = vmatpush1.msra.mxu0 0.0
    %2012 = vmatprep.subr.mxu0 0.0
    %2013 = vmatpush1.msra.mxu0 0.0
    %2014 = vmatprep.subr.mxu0 0.0
    %2015 = vmatpush1.msra.mxu0 0.0
    %2016 = vmatprep.subr.mxu0 0.0
    %2017 = vmatpush1.msra.mxu0 0.0
    %2018 = vmatprep.mubr.f32.mxu0 0.0
    %2019 = vmatmul.mubr.f32.gmra.mrb[0].mxu0 %v1943
    %v2020 = vpop.f32.mrb[0].mxu0
    %v2021 = vadd.f32 0.0, %v2020
    %v2022 = vpop.f32.mrb[0].mxu0
    %2023 = vmatprep.mubr.f32.mxu0 0.0
    %2024 = vmatmul.mubr.f32.gmra.mrb[0].mxu0 %v1946
    %v2025 = vpop.f32.mrb[0].mxu0
    %v2026 = vadd.f32 0.0, %v2025
    %v2027 = vpop.f32.mrb[0].mxu0
    %2028 = vmatprep.mubr.f32.mxu0 0.0
    %2029 = vmatmul.mubr.f32.gmra.mrb[0].mxu0 %v1949
    %v2030 = vpop.f32.mrb[0].mxu0
    %v2031 = vadd.f32 0.0, %v2030
    %v2032 = vpop.f32.mrb[0].mxu0
    %2033 = vmatprep.mubr.f32.mxu0 0.0
    %2034 = vmatmul.mubr.f32.gmra.mrb[0].mxu0 %v1952
    %v2035 = vpop.f32.mrb[0].mxu0
    %v2036 = vadd.f32 0.0, %v2035
    %v2037 = vpop.f32.mrb[0].mxu0
    %2038 = vdwg.mxu0
    %2039 = vmatprep.subr.mxu0 0.0
    %2040 = vmatpush1.msra.mxu0 %v138
    %2041 = vmatprep.subr.mxu0 0.0
    %2042 = vmatpush1.msra.mxu0 %v139
    %2043 = vmatprep.subr.mxu0 0.0
    %2044 = vmatpush1.msra.mxu0 %v140
    %2045 = vmatprep.subr.mxu0 0.0
    %2046 = vmatpush1.msra.mxu0 %v141
    %2047 = vmatprep.subr.mxu0 0.0
    %2048 = vmatpush1.msra.mxu0 %v142
    %2049 = vmatprep.subr.mxu0 0.0
    %2050 = vmatpush1.msra.mxu0 %v143
    %2051 = vmatprep.subr.mxu0 0.0
    %2052 = vmatpush1.msra.mxu0 %v144
    %2053 = vmatprep.subr.mxu0 0.0
    %2054 = vmatpush1.msra.mxu0 %v145
    %2055 = vmatprep.subr.mxu0 0.0
    %2056 = vmatpush1.msra.mxu0 0.0
    %2057 = vmatprep.subr.mxu0 0.0
    %2058 = vmatpush1.msra.mxu0 0.0
    %2059 = vmatprep.subr.mxu0 0.0
    %2060 = vmatpush1.msra.mxu0 0.0
    %2061 = vmatprep.subr.mxu0 0.0
    %2062 = vmatpush1.msra.mxu0 0.0
    %2063 = vmatprep.subr.mxu0 0.0
    %2064 = vmatpush1.msra.mxu0 0.0
    %2065 = vmatprep.subr.mxu0 0.0
    %2066 = vmatpush1.msra.mxu0 0.0
    %2067 = vmatprep.subr.mxu0 0.0
    %2068 = vmatpush1.msra.mxu0 0.0
    %2069 = vmatprep.subr.mxu0 0.0
    %2070 = vmatpush1.msra.mxu0 0.0
    %2071 = vmatprep.subr.mxu0 0.0
    %2072 = vmatpush1.msra.mxu0 0.0
    %2073 = vmatprep.subr.mxu0 0.0
    %2074 = vmatpush1.msra.mxu0 0.0
    %2075 = vmatprep.subr.mxu0 0.0
    %2076 = vmatpush1.msra.mxu0 0.0
    %2077 = vmatprep.subr.mxu0 0.0
    %2078 = vmatpush1.msra.mxu0 0.0
    %2079 = vmatprep.subr.mxu0 0.0
    %2080 = vmatpush1.msra.mxu0 0.0
    %2081 = vmatprep.subr.mxu0 0.0
    %2082 = vmatpush1.msra.mxu0 0.0
    %2083 = vmatprep.subr.mxu0 0.0
    %2084 = vmatpush1.msra.mxu0 0.0
    %2085 = vmatprep.subr.mxu0 0.0
    %2086 = vmatpush1.msra.mxu0 0.0
    %2087 = vmatprep.subr.mxu0 0.0
    %2088 = vmatpush1.msra.mxu0 0.0
    %2089 = vmatprep.subr.mxu0 0.0
    %2090 = vmatpush1.msra.mxu0 0.0
    %2091 = vmatprep.subr.mxu0 0.0
    %2092 = vmatpush1.msra.mxu0 0.0
    %2093 = vmatprep.subr.mxu0 0.0
    %2094 = vmatpush1.msra.mxu0 0.0
    %2095 = vmatprep.subr.mxu0 0.0
    %2096 = vmatpush1.msra.mxu0 0.0
    %2097 = vmatprep.subr.mxu0 0.0
    %2098 = vmatpush1.msra.mxu0 0.0
    %2099 = vmatprep.subr.mxu0 0.0
    %2100 = vmatpush1.msra.mxu0 0.0
    %2101 = vmatprep.subr.mxu0 0.0
    %2102 = vmatpush1.msra.mxu0 0.0
    %2103 = vmatprep.mubr.f32.mxu0 0.0
    %2104 = vmatmul.mubr.f32.gmra.mrb[0].mxu0 %v1943
    %v2105 = vpop.f32.mrb[0].mxu0
    %v2106 = vadd.f32 0.0, %v2105
    %v2107 = vpop.f32.mrb[0].mxu0
    %2108 = vmatprep.mubr.f32.mxu0 0.0
    %2109 = vmatmul.mubr.f32.gmra.mrb[0].mxu0 %v1946
    %v2110 = vpop.f32.mrb[0].mxu0
    %v2111 = vadd.f32 0.0, %v2110
    %v2112 = vpop.f32.mrb[0].mxu0
    %2113 = vmatprep.mubr.f32.mxu0 0.0
    %2114 = vmatmul.mubr.f32.gmra.mrb[0].mxu0 %v1949
    %v2115 = vpop.f32.mrb[0].mxu0
    %v2116 = vadd.f32 0.0, %v2115
    %v2117 = vpop.f32.mrb[0].mxu0
    %2118 = vmatprep.mubr.f32.mxu0 0.0
    %2119 = vmatmul.mubr.f32.gmra.mrb[0].mxu0 %v1952
    %v2120 = vpop.f32.mrb[0].mxu0
    %v2121 = vadd.f32 0.0, %v2120
    %v2122 = vpop.f32.mrb[0].mxu0
    %2123 = vdwg.mxu0
    %v2124 = vmax.f32 %v2106, 1e-30
    %v2125 = vmax.f32 %v2111, 1e-30
    %v2126 = vmax.f32 %v2116, 1e-30
    %v2127 = vmax.f32 %v2121, 1e-30
    %v2128 = vrcp.pop %v2124
    %v2129 = vrcp.pop %v2125
    %v2130 = vrcp.pop %v2126
    %v2131 = vrcp.pop %v2127
    %v2132 = vmul.f32 %v2021, %v2128
    %v2133 = vmul.f32 %v2026, %v2129
    %v2134 = vmul.f32 %v2031, %v2130
    %v2135 = vmul.f32 %v2036, %v2131
    %v2136 = vlaneseq
    %v2137 = vshrl.u32 %v2136, 7
    %v2138 = vsub.s32 2, %v2137
    %v2139 = vrot.slane %v93, %v2138
    %v2141 = vsel %vm154, %v2132, 0
    %v2144 = vsel %vm154, %v2133, 0
    %v2147 = vsel %vm154, %v2134, 0
    %v2150 = vsel %vm154, %v2135, 0
    %2152 = vmatprep.subr.mxu0 0.0
    %2153 = vmatpush1.msra.mxu0 %v1655
    %2154 = vmatprep.subr.mxu0 0.0
    %2155 = vmatpush1.msra.mxu0 %v1656
    %2156 = vmatprep.subr.mxu0 0.0
    %2157 = vmatpush1.msra.mxu0 %v1657
    %2158 = vmatprep.subr.mxu0 0.0
    %2159 = vmatpush1.msra.mxu0 %v1658
    %2160 = vmatprep.subr.mxu0 0.0
    %2161 = vmatpush1.msra.mxu0 0.0
    %2162 = vmatprep.subr.mxu0 0.0
    %2163 = vmatpush1.msra.mxu0 0.0
    %2164 = vmatprep.subr.mxu0 0.0
    %2165 = vmatpush1.msra.mxu0 0.0
    %2166 = vmatprep.subr.mxu0 0.0
    %2167 = vmatpush1.msra.mxu0 0.0
    %2168 = vmatprep.subr.mxu0 0.0
    %2169 = vmatpush1.msra.mxu0 0.0
    %2170 = vmatprep.subr.mxu0 0.0
    %2171 = vmatpush1.msra.mxu0 0.0
    %2172 = vmatprep.subr.mxu0 0.0
    %2173 = vmatpush1.msra.mxu0 0.0
    %2174 = vmatprep.subr.mxu0 0.0
    %2175 = vmatpush1.msra.mxu0 0.0
    %2176 = vmatprep.subr.mxu0 0.0
    %2177 = vmatpush1.msra.mxu0 0.0
    %2178 = vmatprep.subr.mxu0 0.0
    %2179 = vmatpush1.msra.mxu0 0.0
    %2180 = vmatprep.subr.mxu0 0.0
    %2181 = vmatpush1.msra.mxu0 0.0
    %2182 = vmatprep.subr.mxu0 0.0
    %2183 = vmatpush1.msra.mxu0 0.0
    %2184 = vmatprep.subr.mxu0 0.0
    %2185 = vmatpush1.msra.mxu0 0.0
    %2186 = vmatprep.subr.mxu0 0.0
    %2187 = vmatpush1.msra.mxu0 0.0
    %2188 = vmatprep.subr.mxu0 0.0
    %2189 = vmatpush1.msra.mxu0 0.0
    %2190 = vmatprep.subr.mxu0 0.0
    %2191 = vmatpush1.msra.mxu0 0.0
    %2192 = vmatprep.subr.mxu0 0.0
    %2193 = vmatpush1.msra.mxu0 0.0
    %2194 = vmatprep.subr.mxu0 0.0
    %2195 = vmatpush1.msra.mxu0 0.0
    %2196 = vmatprep.subr.mxu0 0.0
    %2197 = vmatpush1.msra.mxu0 0.0
    %2198 = vmatprep.subr.mxu0 0.0
    %2199 = vmatpush1.msra.mxu0 0.0
    %2200 = vmatprep.subr.mxu0 0.0
    %2201 = vmatpush1.msra.mxu0 0.0
    %2202 = vmatprep.subr.mxu0 0.0
    %2203 = vmatpush1.msra.mxu0 0.0
    %2204 = vmatprep.subr.mxu0 0.0
    %2205 = vmatpush1.msra.mxu0 0.0
    %2206 = vmatprep.subr.mxu0 0.0
    %2207 = vmatpush1.msra.mxu0 0.0
    %2208 = vmatprep.subr.mxu0 0.0
    %2209 = vmatpush1.msra.mxu0 0.0
    %2210 = vmatprep.subr.mxu0 0.0
    %2211 = vmatpush1.msra.mxu0 0.0
    %2212 = vmatprep.subr.mxu0 0.0
    %2213 = vmatpush1.msra.mxu0 0.0
    %2214 = vmatprep.subr.mxu0 0.0
    %2215 = vmatpush1.msra.mxu0 0.0
    %2216 = vmatprep.mubr.f32.mxu0 0.0
    %2217 = vmatmul.mubr.f32.gmra.mrb[0].mxu0 %v2141
    %v2218 = vpop.f32.mrb[0].mxu0
    %v2219 = vadd.f32 %v2139, %v2218
    %v2220 = vpop.f32.mrb[0].mxu0
    %2221 = vmatprep.mubr.f32.mxu0 0.0
    %2222 = vmatmul.mubr.f32.gmra.mrb[0].mxu0 %v2144
    %v2223 = vpop.f32.mrb[0].mxu0
    %v2224 = vadd.f32 %v2139, %v2223
    %v2225 = vpop.f32.mrb[0].mxu0
    %2226 = vmatprep.mubr.f32.mxu0 0.0
    %2227 = vmatmul.mubr.f32.gmra.mrb[0].mxu0 %v2147
    %v2228 = vpop.f32.mrb[0].mxu0
    %v2229 = vadd.f32 %v2139, %v2228
    %v2230 = vpop.f32.mrb[0].mxu0
    %2231 = vmatprep.mubr.f32.mxu0 0.0
    %2232 = vmatmul.mubr.f32.gmra.mrb[0].mxu0 %v2150
    %v2233 = vpop.f32.mrb[0].mxu0
    %v2234 = vadd.f32 %v2139, %v2233
    %v2235 = vpop.f32.mrb[0].mxu0
    %2236 = vdwg.mxu0
    %v2237 = vadd.f32 %v2219, %v1395
    %v2238 = vadd.f32 %v2224, %v1396
    %v2239 = vadd.f32 %v2229, %v1397
    %v2240 = vadd.f32 %v2234, %v1398
    %v2241 = vsel %vm154, %v2237, 0.0
    %2242 = vadd.xlane.f32.xlu0 %v2241
    %v2243 = vpop.xlane.xlu0 %2242
    %v2244 = vsel %vm154, %v2238, 0.0
    %2245 = vadd.xlane.f32.xlu0 %v2244
    %v2246 = vpop.xlane.xlu0 %2245
    %v2247 = vsel %vm154, %v2239, 0.0
    %2248 = vadd.xlane.f32.xlu0 %v2247
    %v2249 = vpop.xlane.xlu0 %2248
    %v2250 = vsel %vm154, %v2240, 0.0
    %2251 = vadd.xlane.f32.xlu0 %v2250
    %v2252 = vpop.xlane.xlu0 %2251
    %v2253 = vmul.f32 %v2243, %v486
    %v2254 = vmul.f32 %v2246, %v486
    %v2255 = vmul.f32 %v2249, %v486
    %v2256 = vmul.f32 %v2252, %v486
    %v2257 = vsub.f32 %v2237, %v2253
    %v2258 = vsub.f32 %v2238, %v2254
    %v2259 = vsub.f32 %v2239, %v2255
    %v2260 = vsub.f32 %v2240, %v2256
    %v2261 = vmul.f32 %v2257, %v2257
    %v2262 = vmul.f32 %v2258, %v2258
    %v2263 = vmul.f32 %v2259, %v2259
    %v2264 = vmul.f32 %v2260, %v2260
    %v2265 = vsel %vm154, %v2261, 0.0
    %2266 = vadd.xlane.f32.xlu0 %v2265
    %v2267 = vpop.xlane.xlu0 %2266
    %v2268 = vsel %vm154, %v2262, 0.0
    %2269 = vadd.xlane.f32.xlu0 %v2268
    %v2270 = vpop.xlane.xlu0 %2269
    %v2271 = vsel %vm154, %v2263, 0.0
    %2272 = vadd.xlane.f32.xlu0 %v2271
    %v2273 = vpop.xlane.xlu0 %2272
    %v2274 = vsel %vm154, %v2264, 0.0
    %2275 = vadd.xlane.f32.xlu0 %v2274
    %v2276 = vpop.xlane.xlu0 %2275
    %v2277 = vmul.f32 %v2267, %v486
    %v2278 = vmul.f32 %v2270, %v486
    %v2279 = vmul.f32 %v2273, %v486
    %v2280 = vmul.f32 %v2276, %v486
    %v2281 = vadd.f32 %v2277, 1e-05
    %v2282 = vadd.f32 %v2278, 1e-05
    %v2283 = vadd.f32 %v2279, 1e-05
    %v2284 = vadd.f32 %v2280, 1e-05
    %v2285 = vrsqrt.pop %v2281
    %v2286 = vrsqrt.pop %v2282
    %v2287 = vrsqrt.pop %v2283
    %v2288 = vrsqrt.pop %v2284
    %v2289 = vmul.f32 %v2257, %v2285
    %v2290 = vmul.f32 %v2258, %v2286
    %v2291 = vmul.f32 %v2259, %v2287
    %v2292 = vmul.f32 %v2260, %v2288
    %v2293 = vlaneseq
    %v2294 = vshrl.u32 %v2293, 7
    %v2295 = vsub.s32 7, %v2294
    %v2296 = vrot.slane %v92, %v2295
    %v2297 = vmul.f32 %v2289, %v2296
    %v2298 = vmul.f32 %v2290, %v2296
    %v2299 = vmul.f32 %v2291, %v2296
    %v2300 = vmul.f32 %v2292, %v2296
    %v2301 = vlaneseq
    %v2302 = vshrl.u32 %v2301, 7
    %v2303 = vsub.s32 0, %v2302
    %v2304 = vrot.slane %v93, %v2303
    %v2305 = vadd.f32 %v2297, %v2304
    %v2306 = vadd.f32 %v2298, %v2304
    %v2307 = vadd.f32 %v2299, %v2304
    %v2308 = vadd.f32 %v2300, %v2304
    %v2309 = vld [vmem:[%s2 + $0x38] sm:$0xff]
    %v2310 = vld [vmem:[%s2 + $0x40] sm:$0xff]
    %v2311 = vld [vmem:[%s2 + $0x88] sm:$0xff]
    %v2312 = vld [vmem:[%s2 + $0x90] sm:$0xff]
    %v2313 = vld [vmem:[%s2 + $0xd8] sm:$0xff]
    %v2314 = vld [vmem:[%s2 + $0xe0] sm:$0xff]
    %v2315 = vld [vmem:[%s2 + $0x128] sm:$0xff]
    %v2316 = vld [vmem:[%s2 + $0x130] sm:$0xff]
    %v2317 = vld [vmem:[%s5] sm:$0x3]
    %v2319 = vlaneseq
    %v2320 = vshrl.u32 %v2319, 7
    %v2321 = vsub.s32 0, %v2320
    %v2322 = vrot.slane %v2317, %v2321
    %v2323 = vlaneseq
    %v2324 = vshrl.u32 %v2323, 7
    %v2325 = vsub.s32 1, %v2324
    %v2326 = vrot.slane %v2317, %v2325
    %v2330 = vsel %vm154, %v2305, 0
    %v2333 = vsel %vm154, %v2306, 0
    %v2336 = vsel %vm154, %v2307, 0
    %v2339 = vsel %vm154, %v2308, 0
    %2341 = vmatprep.subr.mxu0 %v2310
    %2342 = vmatpush1.msra.mxu0 %v2309
    %2343 = vmatprep.subr.mxu0 %v2312
    %2344 = vmatpush1.msra.mxu0 %v2311
    %2345 = vmatprep.subr.mxu0 %v2314
    %2346 = vmatpush1.msra.mxu0 %v2313
    %2347 = vmatprep.subr.mxu0 %v2316
    %2348 = vmatpush1.msra.mxu0 %v2315
    %2349 = vmatprep.subr.mxu0 0.0
    %2350 = vmatpush1.msra.mxu0 0.0
    %2351 = vmatprep.subr.mxu0 0.0
    %2352 = vmatpush1.msra.mxu0 0.0
    %2353 = vmatprep.subr.mxu0 0.0
    %2354 = vmatpush1.msra.mxu0 0.0
    %2355 = vmatprep.subr.mxu0 0.0
    %2356 = vmatpush1.msra.mxu0 0.0
    %2357 = vmatprep.subr.mxu0 0.0
    %2358 = vmatpush1.msra.mxu0 0.0
    %2359 = vmatprep.subr.mxu0 0.0
    %2360 = vmatpush1.msra.mxu0 0.0
    %2361 = vmatprep.subr.mxu0 0.0
    %2362 = vmatpush1.msra.mxu0 0.0
    %2363 = vmatprep.subr.mxu0 0.0
    %2364 = vmatpush1.msra.mxu0 0.0
    %2365 = vmatprep.subr.mxu0 0.0
    %2366 = vmatpush1.msra.mxu0 0.0
    %2367 = vmatprep.subr.mxu0 0.0
    %2368 = vmatpush1.msra.mxu0 0.0
    %2369 = vmatprep.subr.mxu0 0.0
    %2370 = vmatpush1.msra.mxu0 0.0
    %2371 = vmatprep.subr.mxu0 0.0
    %2372 = vmatpush1.msra.mxu0 0.0
    %2373 = vmatprep.subr.mxu0 0.0
    %2374 = vmatpush1.msra.mxu0 0.0
    %2375 = vmatprep.subr.mxu0 0.0
    %2376 = vmatpush1.msra.mxu0 0.0
    %2377 = vmatprep.subr.mxu0 0.0
    %2378 = vmatpush1.msra.mxu0 0.0
    %2379 = vmatprep.subr.mxu0 0.0
    %2380 = vmatpush1.msra.mxu0 0.0
    %2381 = vmatprep.subr.mxu0 0.0
    %2382 = vmatpush1.msra.mxu0 0.0
    %2383 = vmatprep.subr.mxu0 0.0
    %2384 = vmatpush1.msra.mxu0 0.0
    %2385 = vmatprep.subr.mxu0 0.0
    %2386 = vmatpush1.msra.mxu0 0.0
    %2387 = vmatprep.subr.mxu0 0.0
    %2388 = vmatpush1.msra.mxu0 0.0
    %2389 = vmatprep.subr.mxu0 0.0
    %2390 = vmatpush1.msra.mxu0 0.0
    %2391 = vmatprep.subr.mxu0 0.0
    %2392 = vmatpush1.msra.mxu0 0.0
    %2393 = vmatprep.subr.mxu0 0.0
    %2394 = vmatpush1.msra.mxu0 0.0
    %2395 = vmatprep.subr.mxu0 0.0
    %2396 = vmatpush1.msra.mxu0 0.0
    %2397 = vmatprep.subr.mxu0 0.0
    %2398 = vmatpush1.msra.mxu0 0.0
    %2399 = vmatprep.subr.mxu0 0.0
    %2400 = vmatpush1.msra.mxu0 0.0
    %2401 = vmatprep.subr.mxu0 0.0
    %2402 = vmatpush1.msra.mxu0 0.0
    %2403 = vmatprep.subr.mxu0 0.0
    %2404 = vmatpush1.msra.mxu0 0.0
    %2405 = vmatprep.mubr.f32.mxu0 0.0
    %2406 = vmatmul.mubr.f32.gmra.mrb[0].mxu0 %v2330
    %v2407 = vpop.f32.mrb[0].mxu0
    %v2408 = vadd.f32 %v2322, %v2407
    %v2409 = vpop.f32.mrb[0].mxu0
    %v2410 = vadd.f32 %v2326, %v2409
    %2411 = vmatprep.mubr.f32.mxu0 0.0
    %2412 = vmatmul.mubr.f32.gmra.mrb[0].mxu0 %v2333
    %v2413 = vpop.f32.mrb[0].mxu0
    %v2414 = vadd.f32 %v2322, %v2413
    %v2415 = vpop.f32.mrb[0].mxu0
    %v2416 = vadd.f32 %v2326, %v2415
    %2417 = vmatprep.mubr.f32.mxu0 0.0
    %2418 = vmatmul.mubr.f32.gmra.mrb[0].mxu0 %v2336
    %v2419 = vpop.f32.mrb[0].mxu0
    %v2420 = vadd.f32 %v2322, %v2419
    %v2421 = vpop.f32.mrb[0].mxu0
    %v2422 = vadd.f32 %v2326, %v2421
    %2423 = vmatprep.mubr.f32.mxu0 0.0
    %2424 = vmatmul.mubr.f32.gmra.mrb[0].mxu0 %v2339
    %v2425 = vpop.f32.mrb[0].mxu0
    %v2426 = vadd.f32 %v2322, %v2425
    %v2427 = vpop.f32.mrb[0].mxu0
    %v2428 = vadd.f32 %v2326, %v2427
    %2429 = vdwg.mxu0
    %v2430 = vmul.f32 %v2410, 0.5
    %v2431 = vmul.f32 %v2416, 0.5
    %v2432 = vmul.f32 %v2422, 0.5
    %v2433 = vmul.f32 %v2428, 0.5
    %v2434 = vmul.f32 %v2410, 0.70710677
    %v2435 = vmul.f32 %v2416, 0.70710677
    %v2436 = vmul.f32 %v2422, 0.70710677
    %v2437 = vmul.f32 %v2428, 0.70710677
    %v2438 = verf.f32.pop %v2434
    %v2439 = verf.f32.pop %v2435
    %v2440 = verf.f32.pop %v2436
    %v2441 = verf.f32.pop %v2437
    %v2442 = vadd.f32 %v2438, 1.0
    %v2443 = vadd.f32 %v2439, 1.0
    %v2444 = vadd.f32 %v2440, 1.0
    %v2445 = vadd.f32 %v2441, 1.0
    %v2446 = vmul.f32 %v2430, %v2442
    %v2447 = vmul.f32 %v2431, %v2443
    %v2448 = vmul.f32 %v2432, %v2444
    %v2449 = vmul.f32 %v2433, %v2445
    %v2450 = vmul.f32 %v2408, %v2446
    %v2451 = vmul.f32 %v2414, %v2447
    %v2452 = vmul.f32 %v2420, %v2448
    %v2453 = vmul.f32 %v2426, %v2449
    %v2454 = vld [vmem:[%s3] sm:$0xff]
    %v2455 = vld [vmem:[%s3 + $0x8] sm:$0xff]
    %v2456 = vld [vmem:[%s3 + $0x10] sm:$0xff]
    %v2457 = vld [vmem:[%s3 + $0x18] sm:$0xff]
    %v2458 = vld [vmem:[%s3 + $0x20] sm:$0xff]
    %v2459 = vld [vmem:[%s3 + $0x28] sm:$0xff]
    %v2460 = vld [vmem:[%s3 + $0x30] sm:$0xff]
    %v2461 = vld [vmem:[%s3 + $0x38] sm:$0xff]
    %v2462 = vld [vmem:[%s3 + $0x40] sm:$0xff]
    %v2463 = vld [vmem:[%s3 + $0x48] sm:$0xff]
    %v2464 = vld [vmem:[%s3 + $0x50] sm:$0xff]
    %v2465 = vld [vmem:[%s3 + $0x58] sm:$0xff]
    %v2466 = vld [vmem:[%s3 + $0x60] sm:$0xff]
    %v2467 = vld [vmem:[%s3 + $0x68] sm:$0xff]
    %v2468 = vld [vmem:[%s3 + $0x70] sm:$0xff]
    %v2469 = vld [vmem:[%s3 + $0x78] sm:$0xff]
    %v2470 = vlaneseq
    %v2471 = vshrl.u32 %v2470, 7
    %v2472 = vsub.s32 3, %v2471
    %v2473 = vrot.slane %v93, %v2472
    %2474 = vmatprep.subr.mxu0 0.0
    %2475 = vmatpush1.msra.mxu0 %v2454
    %2476 = vmatprep.subr.mxu0 0.0
    %2477 = vmatpush1.msra.mxu0 %v2455
    %2478 = vmatprep.subr.mxu0 0.0
    %2479 = vmatpush1.msra.mxu0 %v2456
    %2480 = vmatprep.subr.mxu0 0.0
    %2481 = vmatpush1.msra.mxu0 %v2457
    %2482 = vmatprep.subr.mxu0 0.0
    %2483 = vmatpush1.msra.mxu0 %v2458
    %2484 = vmatprep.subr.mxu0 0.0
    %2485 = vmatpush1.msra.mxu0 %v2459
    %2486 = vmatprep.subr.mxu0 0.0
    %2487 = vmatpush1.msra.mxu0 %v2460
    %2488 = vmatprep.subr.mxu0 0.0
    %2489 = vmatpush1.msra.mxu0 %v2461
    %2490 = vmatprep.subr.mxu0 0.0
    %2491 = vmatpush1.msra.mxu0 %v2462
    %2492 = vmatprep.subr.mxu0 0.0
    %2493 = vmatpush1.msra.mxu0 %v2463
    %2494 = vmatprep.subr.mxu0 0.0
    %2495 = vmatpush1.msra.mxu0 %v2464
    %2496 = vmatprep.subr.mxu0 0.0
    %2497 = vmatpush1.msra.mxu0 %v2465
    %2498 = vmatprep.subr.mxu0 0.0
    %2499 = vmatpush1.msra.mxu0 %v2466
    %2500 = vmatprep.subr.mxu0 0.0
    %2501 = vmatpush1.msra.mxu0 %v2467
    %2502 = vmatprep.subr.mxu0 0.0
    %2503 = vmatpush1.msra.mxu0 %v2468
    %2504 = vmatprep.subr.mxu0 0.0
    %2505 = vmatpush1.msra.mxu0 %v2469
    %2506 = vmatprep.subr.mxu0 0.0
    %2507 = vmatpush1.msra.mxu0 0.0
    %2508 = vmatprep.subr.mxu0 0.0
    %2509 = vmatpush1.msra.mxu0 0.0
    %2510 = vmatprep.subr.mxu0 0.0
    %2511 = vmatpush1.msra.mxu0 0.0
    %2512 = vmatprep.subr.mxu0 0.0
    %2513 = vmatpush1.msra.mxu0 0.0
    %2514 = vmatprep.subr.mxu0 0.0
    %2515 = vmatpush1.msra.mxu0 0.0
    %2516 = vmatprep.subr.mxu0 0.0
    %2517 = vmatpush1.msra.mxu0 0.0
    %2518 = vmatprep.subr.mxu0 0.0
    %2519 = vmatpush1.msra.mxu0 0.0
    %2520 = vmatprep.subr.mxu0 0.0
    %2521 = vmatpush1.msra.mxu0 0.0
    %2522 = vmatprep.subr.mxu0 0.0
    %2523 = vmatpush1.msra.mxu0 0.0
    %2524 = vmatprep.subr.mxu0 0.0
    %2525 = vmatpush1.msra.mxu0 0.0
    %2526 = vmatprep.subr.mxu0 0.0
    %2527 = vmatpush1.msra.mxu0 0.0
    %2528 = vmatprep.subr.mxu0 0.0
    %2529 = vmatpush1.msra.mxu0 0.0
    %2530 = vmatprep.subr.mxu0 0.0
    %2531 = vmatpush1.msra.mxu0 0.0
    %2532 = vmatprep.subr.mxu0 0.0
    %2533 = vmatpush1.msra.mxu0 0.0
    %2534 = vmatprep.subr.mxu0 0.0
    %2535 = vmatpush1.msra.mxu0 0.0
    %2536 = vmatprep.subr.mxu0 0.0
    %2537 = vmatpush1.msra.mxu0 0.0
    %2538 = vmatprep.mubr.f32.mxu0 0.0
    %2539 = vmatmul.mubr.f32.gmra.mrb[0].mxu0 %v2450
    %v2540 = vpop.f32.mrb[0].mxu0
    %v2541 = vadd.f32 %v2473, %v2540
    %v2542 = vpop.f32.mrb[0].mxu0
    %2543 = vmatprep.mubr.f32.mxu0 0.0
    %2544 = vmatmul.mubr.f32.gmra.mrb[0].mxu0 %v2451
    %v2545 = vpop.f32.mrb[0].mxu0
    %v2546 = vadd.f32 %v2473, %v2545
    %v2547 = vpop.f32.mrb[0].mxu0
    %2548 = vmatprep.mubr.f32.mxu0 0.0
    %2549 = vmatmul.mubr.f32.gmra.mrb[0].mxu0 %v2452
    %v2550 = vpop.f32.mrb[0].mxu0
    %v2551 = vadd.f32 %v2473, %v2550
    %v2552 = vpop.f32.mrb[0].mxu0
    %2553 = vmatprep.mubr.f32.mxu0 0.0
    %2554 = vmatmul.mubr.f32.gmra.mrb[0].mxu0 %v2453
    %v2555 = vpop.f32.mrb[0].mxu0
    %v2556 = vadd.f32 %v2473, %v2555
    %v2557 = vpop.f32.mrb[0].mxu0
    %2558 = vdwg.mxu0
    %v2559 = vadd.f32 %v2541, %v2237
    %v2560 = vadd.f32 %v2546, %v2238
    %v2561 = vadd.f32 %v2551, %v2239
    %v2562 = vadd.f32 %v2556, %v2240
    %v2563 = vld [vmem:[%s2 + $0x48] sm:$0xff]
    %v2564 = vld [vmem:[%s2 + $0x98] sm:$0xff]
    %v2565 = vld [vmem:[%s2 + $0xe8] sm:$0xff]
    %v2566 = vld [vmem:[%s2 + $0x138] sm:$0xff]
    %v2567 = vlaneseq
    %v2568 = vshrl.u32 %v2567, 7
    %v2569 = vsub.s32 4, %v2568
    %v2570 = vrot.slane %v93, %v2569
    %v2572 = vsel %vm154, %v2559, 0
    %v2575 = vsel %vm154, %v2560, 0
    %v2578 = vsel %vm154, %v2561, 0
    %v2581 = vsel %vm154, %v2562, 0
    %2583 = vmatprep.subr.mxu0 0.0
    %2584 = vmatpush1.msra.mxu0 %v2563
    %2585 = vmatprep.subr.mxu0 0.0
    %2586 = vmatpush1.msra.mxu0 %v2564
    %2587 = vmatprep.subr.mxu0 0.0
    %2588 = vmatpush1.msra.mxu0 %v2565
    %2589 = vmatprep.subr.mxu0 0.0
    %2590 = vmatpush1.msra.mxu0 %v2566
    %2591 = vmatprep.subr.mxu0 0.0
    %2592 = vmatpush1.msra.mxu0 0.0
    %2593 = vmatprep.subr.mxu0 0.0
    %2594 = vmatpush1.msra.mxu0 0.0
    %2595 = vmatprep.subr.mxu0 0.0
    %2596 = vmatpush1.msra.mxu0 0.0
    %2597 = vmatprep.subr.mxu0 0.0
    %2598 = vmatpush1.msra.mxu0 0.0
    %2599 = vmatprep.subr.mxu0 0.0
    %2600 = vmatpush1.msra.mxu0 0.0
    %2601 = vmatprep.subr.mxu0 0.0
    %2602 = vmatpush1.msra.mxu0 0.0
    %2603 = vmatprep.subr.mxu0 0.0
    %2604 = vmatpush1.msra.mxu0 0.0
    %2605 = vmatprep.subr.mxu0 0.0
    %2606 = vmatpush1.msra.mxu0 0.0
    %2607 = vmatprep.subr.mxu0 0.0
    %2608 = vmatpush1.msra.mxu0 0.0
    %2609 = vmatprep.subr.mxu0 0.0
    %2610 = vmatpush1.msra.mxu0 0.0
    %2611 = vmatprep.subr.mxu0 0.0
    %2612 = vmatpush1.msra.mxu0 0.0
    %2613 = vmatprep.subr.mxu0 0.0
    %2614 = vmatpush1.msra.mxu0 0.0
    %2615 = vmatprep.subr.mxu0 0.0
    %2616 = vmatpush1.msra.mxu0 0.0
    %2617 = vmatprep.subr.mxu0 0.0
    %2618 = vmatpush1.msra.mxu0 0.0
    %2619 = vmatprep.subr.mxu0 0.0
    %2620 = vmatpush1.msra.mxu0 0.0
    %2621 = vmatprep.subr.mxu0 0.0
    %2622 = vmatpush1.msra.mxu0 0.0
    %2623 = vmatprep.subr.mxu0 0.0
    %2624 = vmatpush1.msra.mxu0 0.0
    %2625 = vmatprep.subr.mxu0 0.0
    %2626 = vmatpush1.msra.mxu0 0.0
    %2627 = vmatprep.subr.mxu0 0.0
    %2628 = vmatpush1.msra.mxu0 0.0
    %2629 = vmatprep.subr.mxu0 0.0
    %2630 = vmatpush1.msra.mxu0 0.0
    %2631 = vmatprep.subr.mxu0 0.0
    %2632 = vmatpush1.msra.mxu0 0.0
    %2633 = vmatprep.subr.mxu0 0.0
    %2634 = vmatpush1.msra.mxu0 0.0
    %2635 = vmatprep.subr.mxu0 0.0
    %2636 = vmatpush1.msra.mxu0 0.0
    %2637 = vmatprep.subr.mxu0 0.0
    %2638 = vmatpush1.msra.mxu0 0.0
    %2639 = vmatprep.subr.mxu0 0.0
    %2640 = vmatpush1.msra.mxu0 0.0
    %2641 = vmatprep.subr.mxu0 0.0
    %2642 = vmatpush1.msra.mxu0 0.0
    %2643 = vmatprep.subr.mxu0 0.0
    %2644 = vmatpush1.msra.mxu0 0.0
    %2645 = vmatprep.subr.mxu0 0.0
    %2646 = vmatpush1.msra.mxu0 0.0
    %2647 = vmatprep.mubr.f32.mxu0 0.0
    %2648 = vmatmul.mubr.f32.gmra.mrb[0].mxu0 %v2572
    %v2649 = vpop.f32.mrb[0].mxu0
    %v2650 = vadd.f32 %v2570, %v2649
    %v2651 = vpop.f32.mrb[0].mxu0
    %2652 = vmatprep.mubr.f32.mxu0 0.0
    %2653 = vmatmul.mubr.f32.gmra.mrb[0].mxu0 %v2575
    %v2654 = vpop.f32.mrb[0].mxu0
    %v2655 = vadd.f32 %v2570, %v2654
    %v2656 = vpop.f32.mrb[0].mxu0
    %2657 = vmatprep.mubr.f32.mxu0 0.0
    %2658 = vmatmul.mubr.f32.gmra.mrb[0].mxu0 %v2578
    %v2659 = vpop.f32.mrb[0].mxu0
    %v2660 = vadd.f32 %v2570, %v2659
    %v2661 = vpop.f32.mrb[0].mxu0
    %2662 = vmatprep.mubr.f32.mxu0 0.0
    %2663 = vmatmul.mubr.f32.gmra.mrb[0].mxu0 %v2581
    %v2664 = vpop.f32.mrb[0].mxu0
    %v2665 = vadd.f32 %v2570, %v2664
    %v2666 = vpop.f32.mrb[0].mxu0
    %2667 = vdwg.mxu0
    %v2668 = vadd.f32 %v2650, %v88
    %v2669 = vadd.f32 %v2655, %v89
    %v2670 = vadd.f32 %v2660, %v90
    %v2671 = vadd.f32 %v2665, %v91
    %2672 = vst.msk [vmem:[#allocation10] sm:$0xff] %vm154, %v2668
    %2673 = vst.msk [vmem:[#allocation10 + $0x8] sm:$0xff] %vm154, %v2669
    %2674 = vst.msk [vmem:[#allocation10 + $0x10] sm:$0xff] %vm154, %v2670
    %2675 = vst.msk [vmem:[#allocation10 + $0x18] sm:$0xff] %vm154, %v2671
    // Predicated region
    $region54: #{spatial_transformer.1} parent=1 // pred_check
      _
    $region55: #{spatial_transformer.1} parent=1 // pred_check_branch
      %2677 = sbr.rel (0) target = $region57
    $region56: #{spatial_transformer.1} parent=1 // pred_region
      %s2679 = ssub.s32 512, 512
      %2680 = vsyncadd [#allocation4], %s2679
      %s2681 = sshll.u32 [#allocation10], 4
      %s2682 = int_to_ptr.vmem [resolvable:$true] %s2681
      %2687 = dma.vmem_to_hbm [thread:$0]  %s2682, 512, %s9, [#allocation4], 128, 128, 8
    $region57: #{spatial_transformer.1} parent=1 // pred_fallthru
      _
    // Predicated region
    $region58: #{spatial_transformer.1} parent=1 // pred_check
      _
    $region59: #{spatial_transformer.1} parent=1 // pred_check_branch
      %2689 = sbr.rel (0) target = $region61
    $region60: #{spatial_transformer.1} parent=1 // pred_region
      %2690 = dma.done [#allocation4], 512
    $region61: #{spatial_transformer.1} parent=1 // pred_fallthru
      _
    %2691 = vsyncpa [#allocation3], 1
    %2692 = vsyncpa [#allocation6], 1
    %2693 = vsyncpa [#allocation9], 1
    %2694 = vsyncpa [#allocation4], 1

</llo_original>
